<compile_context>
chip_gen: v7x
topology: tpu7x:2x2x1
jax: 0.10.0
libtpu: 0.0.40
codegen_flags: <defaults>
</compile_context>

<pallas_src>
import jax
import jax.numpy as jnp
from jax import lax
from jax.experimental import pallas as pl
from jax.experimental.pallas import tpu as pltpu


def spe_kernel(x_ref, o_ref):
    # x_ref / o_ref: (1, N, L) VMEM tiles for the current batch element.
    x = x_ref[0]  # (N, L) f32

    # energy[l1, l2] = sum_n x[n, l1] * x[n, l2]  -> (L, L); contract over the big N dim.
    energy = lax.dot_general(
        x, x, (((0,), (0,)), ((), ())), preferred_element_type=jnp.float32
    )

    # Row-wise softmax over the last dim of the (L, L) energy matrix (stays in VMEM/vregs).
    m = jnp.max(energy, axis=-1, keepdims=True)
    e = jnp.exp(energy - m)
    attn = e / jnp.sum(e, axis=-1, keepdims=True)

    # out[n, l] = sum_k x[n, k] * attn[k, l]  -> (N, L)
    o_ref[0] = jnp.dot(x, attn, preferred_element_type=jnp.float32).astype(o_ref.dtype)


def spe_module(x):
    """SPE_Module forward.  x: (B, C, H, W, L) -> (B, C, H, W, L)."""
    B, C, H, W, L = x.shape
    N = C * H * W
    x_flat = x.reshape(B, N, L).astype(jnp.float32)  # free (contiguous) reshape

    out = pl.pallas_call(
        spe_kernel,
        out_shape=jax.ShapeDtypeStruct((B, N, L), jnp.float32),
        grid=(B,),
        in_specs=[pl.BlockSpec((1, N, L), lambda b: (b, 0, 0))],
        out_specs=pl.BlockSpec((1, N, L), lambda b: (b, 0, 0)),
        compiler_params=pltpu.CompilerParams(
            dimension_semantics=("parallel",),  # batch axis -> both TCs on v7x
        ),
    )(x_flat)

    return out.reshape(B, C, H, W, L).astype(x.dtype)


def spe_module_ref(x):
    """Pure-JAX reference mirroring the PyTorch code line by line."""
    B, C, H, W, L = x.shape
    q = x.reshape(B, -1, L).astype(jnp.float32)            # (B, N, L)
    energy = jnp.einsum("bnl,bnm->blm", q, q)               # (B, L, L) = bmm(k, q)
    attn = jax.nn.softmax(energy, axis=-1)
    out = jnp.einsum("bnl,blm->bnm", q, attn)               # (B, N, L) = bmm(q, attn)
    return out.reshape(B, C, H, W, L)


if __name__ == "__main__":
    # Shapes implied by the forward: x is (B, C, H, W, channle).
    B, C, H, W, L = 2, 4, 16, 16, 32
    key = jax.random.PRNGKey(0)
    # Scale inputs so the attention logits are in a moderate range.
    x = 0.1 * jax.random.normal(key, (B, C, H, W, L), jnp.float32)

    out = jax.jit(spe_module)(x)
    out = jax.block_until_ready(out)

    assert out.shape == (B, C, H, W, L), out.shape
    assert bool(jnp.all(jnp.isfinite(out)))

    ref = spe_module_ref(x)
    max_err = float(jnp.max(jnp.abs(out - ref)))
    assert bool(jnp.allclose(out, ref, rtol=1e-2, atol=1e-2)), max_err

    print("KERNEL_OK")
</pallas_src>

<mosaic_0001>
module attributes {stable_mosaic.version = 11 : i64} {
  func.func @spe_kernel(%arg0: i32, %arg1: memref<1x1024x32xf32, #tpu.memory_space<vmem>>, %arg2: memref<1x1024x32xf32, #tpu.memory_space<vmem>>) attributes {dimension_semantics = [#tpu.dimension_semantics<parallel>], iteration_bounds = array<i64: 2>, scalar_prefetch = 0 : i64, scratch_operands = 0 : i64, tpu.core_type = #tpu.core_type<tc>, window_params = [{transform_indices = @transform_0, window_bounds = array<i64: 1, 1024, 32>}, {transform_indices = @transform_1, window_bounds = array<i64: 1, 1024, 32>}]} {
    %c0 = arith.constant 0 : index
    %c0_0 = arith.constant 0 : index
    %c0_1 = arith.constant 0 : index
    %0 = vector.load %arg1[%c0, %c0_0, %c0_1] : memref<1x1024x32xf32, #tpu.memory_space<vmem>>, vector<1x1024x32xf32>
    %1 = vector.shape_cast %0 : vector<1x1024x32xf32> to vector<1024x32xf32>
    %cst = arith.constant dense<0.000000e+00> : vector<32x32xf32>
    %2 = tpu.matmul %1, %1, %cst {dimension_numbers = #tpu.dot_dimension_numbers<[0], [0], [1], [1], [0, 1, 1, 1], [], []>} : vector<1024x32xf32>, vector<1024x32xf32>, vector<32x32xf32> -> vector<32x32xf32>
    %cst_2 = arith.constant dense<0xFF800000> : vector<32xf32>
    %3 = vector.multi_reduction <maximumf>, %2, %cst_2 [1] : vector<32x32xf32> to vector<32xf32>
    %4 = vector.shape_cast %3 : vector<32xf32> to vector<32x1xf32>
    %5 = vector.broadcast %4 : vector<32x1xf32> to vector<32x32xf32>
    %6 = arith.subf %2, %5 : vector<32x32xf32>
    %7 = math.exp %6 : vector<32x32xf32>
    %cst_3 = arith.constant dense<0.000000e+00> : vector<32xf32>
    %8 = vector.multi_reduction <add>, %7, %cst_3 [1] : vector<32x32xf32> to vector<32xf32>
    %9 = vector.shape_cast %8 : vector<32xf32> to vector<32x1xf32>
    %10 = vector.broadcast %9 : vector<32x1xf32> to vector<32x32xf32>
    %11 = arith.divf %7, %10 : vector<32x32xf32>
    %cst_4 = arith.constant dense<0.000000e+00> : vector<1024x32xf32>
    %12 = tpu.matmul %1, %11, %cst_4 {dimension_numbers = #tpu.dot_dimension_numbers<[1], [0], [0], [1], [0, 0, 1, 1], [], []>} : vector<1024x32xf32>, vector<32x32xf32>, vector<1024x32xf32> -> vector<1024x32xf32>
    %c0_5 = arith.constant 0 : index
    %c0_6 = arith.constant 0 : index
    %c0_7 = arith.constant 0 : index
    %13 = vector.load %arg2[%c0_5, %c0_6, %c0_7] : memref<1x1024x32xf32, #tpu.memory_space<vmem>>, vector<1x1024x32xf32>
    %14 = vector.shape_cast %13 : vector<1x1024x32xf32> to vector<1024x32xf32>
    %15 = vector.shape_cast %12 : vector<1024x32xf32> to vector<1x1024x32xf32>
    tpu.vector_store %arg2[%c0_5, %c0_6, %c0_7], %15 {strides = array<i32>} : memref<1x1024x32xf32, #tpu.memory_space<vmem>>, vector<1x1024x32xf32>,
    return
  }
  func.func @transform_0(%arg0: i32) -> (i32, i32, i32) {
    %c0_i32 = arith.constant 0 : i32
    %c0_i32_0 = arith.constant 0 : i32
    %c0_i32_1 = arith.constant 0 : i32
    return %arg0, %c0_i32, %c0_i32_0 : i32, i32, i32
  }
  func.func @transform_1(%arg0: i32) -> (i32, i32, i32) {
    %c0_i32 = arith.constant 0 : i32
    %c0_i32_0 = arith.constant 0 : i32
    %c0_i32_1 = arith.constant 0 : i32
    return %arg0, %c0_i32, %c0_i32_0 : i32, i32, i32
  }
}

</mosaic_0001>

<llo_original>
// kernel: spe_module.1
$region0: #{spe_module.1}
  #allocation0 [shape = 'u32[]', space=smem, size = 0x4, offset = 0x4, fixed_abs, tag = 'smem constant byte address 0x4 - core index']
  #allocation1 [shape = 'u32[144,128]{1,0:T(1,128)}', space=vmem, size = 0x12000, scoped, tag = 'internal scratch']
  %s0 = inlined_call_operand.hbm [shape: f32[2,1024,32], index: 0, kind: input, shape index: {}]
  %s1 = inlined_call_operand.hbm [shape: f32[2,1024,32], index: 1, kind: output, shape index: {}]
  %s2 = sld [smem:[#allocation0]]
  $region41: #{spe_module.1} parent=0
    _
  %s4 = ssub.s32 1, %s2
  %s5 = scalar_select 0, %s4, %s2
  $region1: #{spe_module.1} parent=0
    #allocation2 [shape = 'u8[1048576]{0}', space=vmem, size = 0x100000, scoped, tag = 'input window, operand 0']
    #allocation3 [shape = 's32[2]{0}', space=sflag, size = 0x8, scoped, tag = 'scoped memory for spe_module.1']
    #allocation4 [shape = 's32[2]{0}', space=sflag, size = 0x8, scoped, tag = 'scoped memory for spe_module.1']
    #allocation5 [shape = 'u8[1048576]{0}', space=vmem, size = 0x100000, scoped, tag = 'output window, operand 0']
    %6 = vsyncpa [#allocation3], 0
    %s7 = scalar_lea.sflag [#allocation3], 1
    %8 = vsyncpa %s7, 0
    %9 = vsyncpa [#allocation4], 0
    %s10 = scalar_lea.sflag [#allocation4], 1
    %11 = vsyncpa %s10, 0
    loop: start=0, step=1, limit=4
    $region2: #{spe_module.1} parent=1 // loop_pre_header
      _
    $region3: #{spe_module.1} parent=1 // loop_header
      %s13 = sphi 0, %s17
      %p14 = scmp.ge.s32.totalorder %s13, 4
      %s23 = sphi 0, %s25
      %s26 = sphi 0, %s23
      %s27 = sphi 0, %s26
      %s43 = sphi 0, %s27
      %s49 = sphi 0, %s51
      %s52 = sphi 0, %s49
      %s53 = sphi 0, %s52
      %s69 = sphi 0, %s53
    $region4: #{spe_module.1} parent=1 // loop_header_branch
      %16 = sbr.rel (%p14) target = $region8
    $region5: #{spe_module.1} parent=1 // loop_body
      %s18 = ssub.s32 %s13, 1
      %s19 = ssub.s32 %s13, 2
      %s20 = sadd.s32 %s13, 1
      %s21 = ssub.s32 %s13, %s20
      %p22 = scmp.eq.s32.totalorder %s21, 0
      %s24 = sadd.s32 %s23, 1
      %s25 = scalar_select %p22, %s23, %s24
      %p28 = pneg %p22
      %p29 = scmp.eq.s32.totalorder %s13, 1
      %p30 = por %p28, %p29
      %p31 = scmp.ne.s32.totalorder %s23, %s26
      %p32 = scmp.eq.s32.totalorder %s13, 0
      %p33 = por %p31, %p32
      %p34 = scmp.ne.s32.totalorder %s23, %s26
      %p35 = scmp.eq.s32.totalorder %s18, 1
      %p36 = por %p34, %p35
      %p37 = scmp.ne.s32.totalorder %s26, %s27
      %p38 = scmp.eq.s32.totalorder %s18, 0
      %p39 = por %p37, %p38
      %p40 = scmp.ne.s32.totalorder %s26, %s27
      %p41 = scmp.eq.s32.totalorder %s19, 1
      %p42 = por %p40, %p41
      %p44 = scmp.ne.s32.totalorder %s27, %s43
      %p45 = scmp.eq.s32.totalorder %s19, 0
      %p46 = por %p44, %p45
      %s47 = ssub.s32 %s13, %s20
      %p48 = scmp.eq.s32.totalorder %s47, 0
      %s50 = sadd.s32 %s49, 1
      %s51 = scalar_select %p48, %s49, %s50
      %p54 = pneg %p48
      %p55 = scmp.eq.s32.totalorder %s13, 1
      %p56 = por %p54, %p55
      %p57 = scmp.ne.s32.totalorder %s49, %s52
      %p58 = scmp.eq.s32.totalorder %s13, 0
      %p59 = por %p57, %p58
      %p60 = scmp.ne.s32.totalorder %s49, %s52
      %p61 = scmp.eq.s32.totalorder %s18, 1
      %p62 = por %p60, %p61
      %p63 = scmp.ne.s32.totalorder %s52, %s53
      %p64 = scmp.eq.s32.totalorder %s18, 0
      %p65 = por %p63, %p64
      %p66 = scmp.ne.s32.totalorder %s52, %s53
      %p67 = scmp.eq.s32.totalorder %s19, 1
      %p68 = por %p66, %p67
      %p70 = scmp.ne.s32.totalorder %s53, %s69
      %p71 = scmp.eq.s32.totalorder %s19, 0
      %p72 = por %p70, %p71
      %p73 = scmp.le.s32.totalorder 1, %s13
      %p74 = scmp.lt.s32.totalorder %s13, 3
      %p75 = pnand %p73, %p74
      %p76 = pneg %p75
      // Predicated region
      $region9: #{spe_module.1} parent=5 // pred_check
        _
      $region10: #{spe_module.1} parent=5 // pred_check_branch
        %78 = sbr.rel (%p75) target = $region12
      $region11: #{spe_module.1} parent=5 // pred_region
        %s79 = ssub.s32 %s13, 1
      $region12: #{spe_module.1} parent=5 // pred_fallthru
        _
      %p80 = scmp.lt.s32.totalorder %s13, 2
      // Predicated region
      $region13: #{spe_module.1} parent=5 // pred_check
        %p81 = pneg %p80
      $region14: #{spe_module.1} parent=5 // pred_check_branch
        %83 = sbr.rel (%p81) target = $region16
      $region15: #{spe_module.1} parent=5 // pred_region
        // Predicated region
        $region17: #{spe_module.1} parent=15 // pred_check
          %p84 = pneg %p33
        $region18: #{spe_module.1} parent=15 // pred_check_branch
          %86 = sbr.rel (%p84) target = $region20
        $region19: #{spe_module.1} parent=15 // pred_region
          %s87 = sand.u32 %s23, 1
          %s88 = scalar_lea.sflag [#allocation3], %s87
          %s89 = sand.u32 %s23, 1
          %s90 = smul.addr %s89, 1024
          %s91 = scalar_lea.vmem [#allocation2], %s90
          %s93 = ssub.s32 16384, 16384
          %94 = vsyncadd %s88, %s93
          %s95 = smul.addr %s13, 128
          %s96 = smul.addr %s95, 128
          %s97 = scalar_lea.hbm %s0, %s96
          %s98 = sshll.u32 %s91, 4
          %s99 = int_to_ptr.vmem [resolvable:$true] %s98
          %104 = dma.hbm_to_vmem [thread:$0]  %s97, 16384, %s99, %s88, 128, 128, 8
        $region20: #{spe_module.1} parent=15 // pred_fallthru
          _
      $region16: #{spe_module.1} parent=5 // pred_fallthru
        _
      %p105 = scmp.le.s32.totalorder 1, %s13
      %p106 = scmp.lt.s32.totalorder %s13, 3
      %p107 = pnand %p105, %p106
      %p108 = pneg %p107
      // Predicated region
      $region21: #{spe_module.1} parent=5 // pred_check
        _
      $region22: #{spe_module.1} parent=5 // pred_check_branch
        %110 = sbr.rel (%p107) target = $region24
      $region23: #{spe_module.1} parent=5 // pred_region
        %s111 = ssub.s32 %s13, 1
        %s112 = sand.u32 %s26, 1
        %s113 = scalar_lea.sflag [#allocation3], %s112
        %s114 = sand.u32 %s26, 1
        %s115 = smul.addr %s114, 1024
        %s116 = scalar_lea.vmem [#allocation2], %s115
        // Predicated region
        $region25: #{spe_module.1} parent=23 // pred_check
          %p117 = pneg %p39
        $region26: #{spe_module.1} parent=23 // pred_check_branch
          %119 = sbr.rel (%p117) target = $region28
        $region27: #{spe_module.1} parent=23 // pred_region
          %120 = dma.done %s113, 16384
        $region28: #{spe_module.1} parent=23 // pred_fallthru
          _
        %s121 = sand.u32 %s26, 1
        %s122 = scalar_lea.sflag [#allocation3], %s121
        %s123 = sand.u32 %s26, 1
        %s124 = smul.addr %s123, 1024
        %s125 = scalar_lea.vmem [#allocation2], %s124
        %p126 = pneg %p39
        %p127 = pneg %p36
        %p128 = pneg %p65
        %p129 = pneg %p62
        %s130 = sand.u32 %s52, 1
        %s131 = scalar_lea.sflag [#allocation4], %s130
        %s132 = sand.u32 %s52, 1
        %s133 = smul.addr %s132, 1024
        %s134 = scalar_lea.vmem [#allocation5], %s133
        %v135 = vld [vmem:[%s116] sm:$0xff]
        %v136 = vld [vmem:[%s116 + $0x8] sm:$0xff]
        %v137 = vld [vmem:[%s116 + $0x10] sm:$0xff]
        %v138 = vld [vmem:[%s116 + $0x18] sm:$0xff]
        %v139 = vld [vmem:[%s116 + $0x20] sm:$0xff]
        %v140 = vld [vmem:[%s116 + $0x28] sm:$0xff]
        %v141 = vld [vmem:[%s116 + $0x30] sm:$0xff]
        %v142 = vld [vmem:[%s116 + $0x38] sm:$0xff]
        %v143 = vld [vmem:[%s116 + $0x40] sm:$0xff]
        %v144 = vld [vmem:[%s116 + $0x48] sm:$0xff]
        %v145 = vld [vmem:[%s116 + $0x50] sm:$0xff]
        %v146 = vld [vmem:[%s116 + $0x58] sm:$0xff]
        %v147 = vld [vmem:[%s116 + $0x60] sm:$0xff]
        %v148 = vld [vmem:[%s116 + $0x68] sm:$0xff]
        %v149 = vld [vmem:[%s116 + $0x70] sm:$0xff]
        %v150 = vld [vmem:[%s116 + $0x78] sm:$0xff]
        %v151 = vld [vmem:[%s116 + $0x80] sm:$0xff]
        %v152 = vld [vmem:[%s116 + $0x88] sm:$0xff]
        %v153 = vld [vmem:[%s116 + $0x90] sm:$0xff]
        %v154 = vld [vmem:[%s116 + $0x98] sm:$0xff]
        %v155 = vld [vmem:[%s116 + $0xa0] sm:$0xff]
        %v156 = vld [vmem:[%s116 + $0xa8] sm:$0xff]
        %v157 = vld [vmem:[%s116 + $0xb0] sm:$0xff]
        %v158 = vld [vmem:[%s116 + $0xb8] sm:$0xff]
        %v159 = vld [vmem:[%s116 + $0xc0] sm:$0xff]
        %v160 = vld [vmem:[%s116 + $0xc8] sm:$0xff]
        %v161 = vld [vmem:[%s116 + $0xd0] sm:$0xff]
        %v162 = vld [vmem:[%s116 + $0xd8] sm:$0xff]
        %v163 = vld [vmem:[%s116 + $0xe0] sm:$0xff]
        %v164 = vld [vmem:[%s116 + $0xe8] sm:$0xff]
        %v165 = vld [vmem:[%s116 + $0xf0] sm:$0xff]
        %v166 = vld [vmem:[%s116 + $0xf8] sm:$0xff]
        %v167 = vld [vmem:[%s116 + $0x100] sm:$0xff]
        %v168 = vld [vmem:[%s116 + $0x108] sm:$0xff]
        %v169 = vld [vmem:[%s116 + $0x110] sm:$0xff]
        %v170 = vld [vmem:[%s116 + $0x118] sm:$0xff]
        %v171 = vld [vmem:[%s116 + $0x120] sm:$0xff]
        %v172 = vld [vmem:[%s116 + $0x128] sm:$0xff]
        %v173 = vld [vmem:[%s116 + $0x130] sm:$0xff]
        %v174 = vld [vmem:[%s116 + $0x138] sm:$0xff]
        %v175 = vld [vmem:[%s116 + $0x140] sm:$0xff]
        %v176 = vld [vmem:[%s116 + $0x148] sm:$0xff]
        %v177 = vld [vmem:[%s116 + $0x150] sm:$0xff]
        %v178 = vld [vmem:[%s116 + $0x158] sm:$0xff]
        %v179 = vld [vmem:[%s116 + $0x160] sm:$0xff]
        %v180 = vld [vmem:[%s116 + $0x168] sm:$0xff]
        %v181 = vld [vmem:[%s116 + $0x170] sm:$0xff]
        %v182 = vld [vmem:[%s116 + $0x178] sm:$0xff]
        %v183 = vld [vmem:[%s116 + $0x180] sm:$0xff]
        %v184 = vld [vmem:[%s116 + $0x188] sm:$0xff]
        %v185 = vld [vmem:[%s116 + $0x190] sm:$0xff]
        %v186 = vld [vmem:[%s116 + $0x198] sm:$0xff]
        %v187 = vld [vmem:[%s116 + $0x1a0] sm:$0xff]
        %v188 = vld [vmem:[%s116 + $0x1a8] sm:$0xff]
        %v189 = vld [vmem:[%s116 + $0x1b0] sm:$0xff]
        %v190 = vld [vmem:[%s116 + $0x1b8] sm:$0xff]
        %v191 = vld [vmem:[%s116 + $0x1c0] sm:$0xff]
        %v192 = vld [vmem:[%s116 + $0x1c8] sm:$0xff]
        %v193 = vld [vmem:[%s116 + $0x1d0] sm:$0xff]
        %v194 = vld [vmem:[%s116 + $0x1d8] sm:$0xff]
        %v195 = vld [vmem:[%s116 + $0x1e0] sm:$0xff]
        %v196 = vld [vmem:[%s116 + $0x1e8] sm:$0xff]
        %v197 = vld [vmem:[%s116 + $0x1f0] sm:$0xff]
        %v198 = vld [vmem:[%s116 + $0x1f8] sm:$0xff]
        %v199 = vld [vmem:[%s116 + $0x200] sm:$0xff]
        %v200 = vld [vmem:[%s116 + $0x208] sm:$0xff]
        %v201 = vld [vmem:[%s116 + $0x210] sm:$0xff]
        %v202 = vld [vmem:[%s116 + $0x218] sm:$0xff]
        %v203 = vld [vmem:[%s116 + $0x220] sm:$0xff]
        %v204 = vld [vmem:[%s116 + $0x228] sm:$0xff]
        %v205 = vld [vmem:[%s116 + $0x230] sm:$0xff]
        %v206 = vld [vmem:[%s116 + $0x238] sm:$0xff]
        %v207 = vld [vmem:[%s116 + $0x240] sm:$0xff]
        %v208 = vld [vmem:[%s116 + $0x248] sm:$0xff]
        %v209 = vld [vmem:[%s116 + $0x250] sm:$0xff]
        %v210 = vld [vmem:[%s116 + $0x258] sm:$0xff]
        %v211 = vld [vmem:[%s116 + $0x260] sm:$0xff]
        %v212 = vld [vmem:[%s116 + $0x268] sm:$0xff]
        %v213 = vld [vmem:[%s116 + $0x270] sm:$0xff]
        %v214 = vld [vmem:[%s116 + $0x278] sm:$0xff]
        %v215 = vld [vmem:[%s116 + $0x280] sm:$0xff]
        %v216 = vld [vmem:[%s116 + $0x288] sm:$0xff]
        %v217 = vld [vmem:[%s116 + $0x290] sm:$0xff]
        %v218 = vld [vmem:[%s116 + $0x298] sm:$0xff]
        %v219 = vld [vmem:[%s116 + $0x2a0] sm:$0xff]
        %v220 = vld [vmem:[%s116 + $0x2a8] sm:$0xff]
        %v221 = vld [vmem:[%s116 + $0x2b0] sm:$0xff]
        %v222 = vld [vmem:[%s116 + $0x2b8] sm:$0xff]
        %v223 = vld [vmem:[%s116 + $0x2c0] sm:$0xff]
        %v224 = vld [vmem:[%s116 + $0x2c8] sm:$0xff]
        %v225 = vld [vmem:[%s116 + $0x2d0] sm:$0xff]
        %v226 = vld [vmem:[%s116 + $0x2d8] sm:$0xff]
        %v227 = vld [vmem:[%s116 + $0x2e0] sm:$0xff]
        %v228 = vld [vmem:[%s116 + $0x2e8] sm:$0xff]
        %v229 = vld [vmem:[%s116 + $0x2f0] sm:$0xff]
        %v230 = vld [vmem:[%s116 + $0x2f8] sm:$0xff]
        %v231 = vld [vmem:[%s116 + $0x300] sm:$0xff]
        %v232 = vld [vmem:[%s116 + $0x308] sm:$0xff]
        %v233 = vld [vmem:[%s116 + $0x310] sm:$0xff]
        %v234 = vld [vmem:[%s116 + $0x318] sm:$0xff]
        %v235 = vld [vmem:[%s116 + $0x320] sm:$0xff]
        %v236 = vld [vmem:[%s116 + $0x328] sm:$0xff]
        %v237 = vld [vmem:[%s116 + $0x330] sm:$0xff]
        %v238 = vld [vmem:[%s116 + $0x338] sm:$0xff]
        %v239 = vld [vmem:[%s116 + $0x340] sm:$0xff]
        %v240 = vld [vmem:[%s116 + $0x348] sm:$0xff]
        %v241 = vld [vmem:[%s116 + $0x350] sm:$0xff]
        %v242 = vld [vmem:[%s116 + $0x358] sm:$0xff]
        %v243 = vld [vmem:[%s116 + $0x360] sm:$0xff]
        %v244 = vld [vmem:[%s116 + $0x368] sm:$0xff]
        %v245 = vld [vmem:[%s116 + $0x370] sm:$0xff]
        %v246 = vld [vmem:[%s116 + $0x378] sm:$0xff]
        %v247 = vld [vmem:[%s116 + $0x380] sm:$0xff]
        %v248 = vld [vmem:[%s116 + $0x388] sm:$0xff]
        %v249 = vld [vmem:[%s116 + $0x390] sm:$0xff]
        %v250 = vld [vmem:[%s116 + $0x398] sm:$0xff]
        %v251 = vld [vmem:[%s116 + $0x3a0] sm:$0xff]
        %v252 = vld [vmem:[%s116 + $0x3a8] sm:$0xff]
        %v253 = vld [vmem:[%s116 + $0x3b0] sm:$0xff]
        %v254 = vld [vmem:[%s116 + $0x3b8] sm:$0xff]
        %v255 = vld [vmem:[%s116 + $0x3c0] sm:$0xff]
        %v256 = vld [vmem:[%s116 + $0x3c8] sm:$0xff]
        %v257 = vld [vmem:[%s116 + $0x3d0] sm:$0xff]
        %v258 = vld [vmem:[%s116 + $0x3d8] sm:$0xff]
        %v259 = vld [vmem:[%s116 + $0x3e0] sm:$0xff]
        %v260 = vld [vmem:[%s116 + $0x3e8] sm:$0xff]
        %v261 = vld [vmem:[%s116 + $0x3f0] sm:$0xff]
        %v262 = vld [vmem:[%s116 + $0x3f8] sm:$0xff]
        %263 = vxpose.xlu0.b32.start [1/16] %v135, 128
        %264 = vxpose.xlu0.b32.cont [2/16] %v136, 128
        %265 = vxpose.xlu0.b32.cont [3/16] %v137, 128
        %266 = vxpose.xlu0.b32.cont [4/16] %v138, 128
        %267 = vxpose.xlu0.b32.cont [5/16] %v139, 128
        %268 = vxpose.xlu0.b32.cont [6/16] %v140, 128
        %269 = vxpose.xlu0.b32.cont [7/16] %v141, 128
        %270 = vxpose.xlu0.b32.cont [8/16] %v142, 128
        %271 = vxpose.xlu0.b32.cont [9/16] %v143, 128
        %272 = vxpose.xlu0.b32.cont [10/16] %v144, 128
        %273 = vxpose.xlu0.b32.cont [11/16] %v145, 128
        %274 = vxpose.xlu0.b32.cont [12/16] %v146, 128
        %275 = vxpose.xlu0.b32.cont [13/16] %v147, 128
        %276 = vxpose.xlu0.b32.cont [14/16] %v148, 128
        %277 = vxpose.xlu0.b32.cont [15/16] %v149, 128
        %278 = vxpose.xlu0.b32.end [16/16] %v150, 128
        %v279 = vpop.trf.xlu0
        %v280 = vpop.trf.xlu0
        %v281 = vpop.trf.xlu0
        %v282 = vpop.trf.xlu0
        %v283 = vpop.trf.xlu0
        %v284 = vpop.trf.xlu0
        %v285 = vpop.trf.xlu0
        %v286 = vpop.trf.xlu0
        %v287 = vpop.trf.xlu0
        %v288 = vpop.trf.xlu0
        %v289 = vpop.trf.xlu0
        %v290 = vpop.trf.xlu0
        %v291 = vpop.trf.xlu0
        %v292 = vpop.trf.xlu0
        %v293 = vpop.trf.xlu0
        %v294 = vpop.trf.xlu0
        %295 = vxpose.xlu0.b32.start [1/16] %v151, 128
        %296 = vxpose.xlu0.b32.cont [2/16] %v152, 128
        %297 = vxpose.xlu0.b32.cont [3/16] %v153, 128
        %298 = vxpose.xlu0.b32.cont [4/16] %v154, 128
        %299 = vxpose.xlu0.b32.cont [5/16] %v155, 128
        %300 = vxpose.xlu0.b32.cont [6/16] %v156, 128
        %301 = vxpose.xlu0.b32.cont [7/16] %v157, 128
        %302 = vxpose.xlu0.b32.cont [8/16] %v158, 128
        %303 = vxpose.xlu0.b32.cont [9/16] %v159, 128
        %304 = vxpose.xlu0.b32.cont [10/16] %v160, 128
        %305 = vxpose.xlu0.b32.cont [11/16] %v161, 128
        %306 = vxpose.xlu0.b32.cont [12/16] %v162, 128
        %307 = vxpose.xlu0.b32.cont [13/16] %v163, 128
        %308 = vxpose.xlu0.b32.cont [14/16] %v164, 128
        %309 = vxpose.xlu0.b32.cont [15/16] %v165, 128
        %310 = vxpose.xlu0.b32.end [16/16] %v166, 128
        %v311 = vpop.trf.xlu0
        %v312 = vpop.trf.xlu0
        %v313 = vpop.trf.xlu0
        %v314 = vpop.trf.xlu0
        %v315 = vpop.trf.xlu0
        %v316 = vpop.trf.xlu0
        %v317 = vpop.trf.xlu0
        %v318 = vpop.trf.xlu0
        %v319 = vpop.trf.xlu0
        %v320 = vpop.trf.xlu0
        %v321 = vpop.trf.xlu0
        %v322 = vpop.trf.xlu0
        %v323 = vpop.trf.xlu0
        %v324 = vpop.trf.xlu0
        %v325 = vpop.trf.xlu0
        %v326 = vpop.trf.xlu0
        %327 = vxpose.xlu0.b32.start [1/16] %v167, 128
        %328 = vxpose.xlu0.b32.cont [2/16] %v168, 128
        %329 = vxpose.xlu0.b32.cont [3/16] %v169, 128
        %330 = vxpose.xlu0.b32.cont [4/16] %v170, 128
        %331 = vxpose.xlu0.b32.cont [5/16] %v171, 128
        %332 = vxpose.xlu0.b32.cont [6/16] %v172, 128
        %333 = vxpose.xlu0.b32.cont [7/16] %v173, 128
        %334 = vxpose.xlu0.b32.cont [8/16] %v174, 128
        %335 = vxpose.xlu0.b32.cont [9/16] %v175, 128
        %336 = vxpose.xlu0.b32.cont [10/16] %v176, 128
        %337 = vxpose.xlu0.b32.cont [11/16] %v177, 128
        %338 = vxpose.xlu0.b32.cont [12/16] %v178, 128
        %339 = vxpose.xlu0.b32.cont [13/16] %v179, 128
        %340 = vxpose.xlu0.b32.cont [14/16] %v180, 128
        %341 = vxpose.xlu0.b32.cont [15/16] %v181, 128
        %342 = vxpose.xlu0.b32.end [16/16] %v182, 128
        %v343 = vpop.trf.xlu0
        %v344 = vpop.trf.xlu0
        %v345 = vpop.trf.xlu0
        %v346 = vpop.trf.xlu0
        %v347 = vpop.trf.xlu0
        %v348 = vpop.trf.xlu0
        %v349 = vpop.trf.xlu0
        %v350 = vpop.trf.xlu0
        %v351 = vpop.trf.xlu0
        %v352 = vpop.trf.xlu0
        %v353 = vpop.trf.xlu0
        %v354 = vpop.trf.xlu0
        %v355 = vpop.trf.xlu0
        %v356 = vpop.trf.xlu0
        %v357 = vpop.trf.xlu0
        %v358 = vpop.trf.xlu0
        %359 = vxpose.xlu0.b32.start [1/16] %v183, 128
        %360 = vxpose.xlu0.b32.cont [2/16] %v184, 128
        %361 = vxpose.xlu0.b32.cont [3/16] %v185, 128
        %362 = vxpose.xlu0.b32.cont [4/16] %v186, 128
        %363 = vxpose.xlu0.b32.cont [5/16] %v187, 128
        %364 = vxpose.xlu0.b32.cont [6/16] %v188, 128
        %365 = vxpose.xlu0.b32.cont [7/16] %v189, 128
        %366 = vxpose.xlu0.b32.cont [8/16] %v190, 128
        %367 = vxpose.xlu0.b32.cont [9/16] %v191, 128
        %368 = vxpose.xlu0.b32.cont [10/16] %v192, 128
        %369 = vxpose.xlu0.b32.cont [11/16] %v193, 128
        %370 = vxpose.xlu0.b32.cont [12/16] %v194, 128
        %371 = vxpose.xlu0.b32.cont [13/16] %v195, 128
        %372 = vxpose.xlu0.b32.cont [14/16] %v196, 128
        %373 = vxpose.xlu0.b32.cont [15/16] %v197, 128
        %374 = vxpose.xlu0.b32.end [16/16] %v198, 128
        %v375 = vpop.trf.xlu0
        %v376 = vpop.trf.xlu0
        %v377 = vpop.trf.xlu0
        %v378 = vpop.trf.xlu0
        %v379 = vpop.trf.xlu0
        %v380 = vpop.trf.xlu0
        %v381 = vpop.trf.xlu0
        %v382 = vpop.trf.xlu0
        %v383 = vpop.trf.xlu0
        %v384 = vpop.trf.xlu0
        %v385 = vpop.trf.xlu0
        %v386 = vpop.trf.xlu0
        %v387 = vpop.trf.xlu0
        %v388 = vpop.trf.xlu0
        %v389 = vpop.trf.xlu0
        %v390 = vpop.trf.xlu0
        %391 = vxpose.xlu0.b32.start [1/16] %v199, 128
        %392 = vxpose.xlu0.b32.cont [2/16] %v200, 128
        %393 = vxpose.xlu0.b32.cont [3/16] %v201, 128
        %394 = vxpose.xlu0.b32.cont [4/16] %v202, 128
        %395 = vxpose.xlu0.b32.cont [5/16] %v203, 128
        %396 = vxpose.xlu0.b32.cont [6/16] %v204, 128
        %397 = vxpose.xlu0.b32.cont [7/16] %v205, 128
        %398 = vxpose.xlu0.b32.cont [8/16] %v206, 128
        %399 = vxpose.xlu0.b32.cont [9/16] %v207, 128
        %400 = vxpose.xlu0.b32.cont [10/16] %v208, 128
        %401 = vxpose.xlu0.b32.cont [11/16] %v209, 128
        %402 = vxpose.xlu0.b32.cont [12/16] %v210, 128
        %403 = vxpose.xlu0.b32.cont [13/16] %v211, 128
        %404 = vxpose.xlu0.b32.cont [14/16] %v212, 128
        %405 = vxpose.xlu0.b32.cont [15/16] %v213, 128
        %406 = vxpose.xlu0.b32.end [16/16] %v214, 128
        %v407 = vpop.trf.xlu0
        %v408 = vpop.trf.xlu0
        %v409 = vpop.trf.xlu0
        %v410 = vpop.trf.xlu0
        %v411 = vpop.trf.xlu0
        %v412 = vpop.trf.xlu0
        %v413 = vpop.trf.xlu0
        %v414 = vpop.trf.xlu0
        %v415 = vpop.trf.xlu0
        %v416 = vpop.trf.xlu0
        %v417 = vpop.trf.xlu0
        %v418 = vpop.trf.xlu0
        %v419 = vpop.trf.xlu0
        %v420 = vpop.trf.xlu0
        %v421 = vpop.trf.xlu0
        %v422 = vpop.trf.xlu0
        %423 = vxpose.xlu0.b32.start [1/16] %v215, 128
        %424 = vxpose.xlu0.b32.cont [2/16] %v216, 128
        %425 = vxpose.xlu0.b32.cont [3/16] %v217, 128
        %426 = vxpose.xlu0.b32.cont [4/16] %v218, 128
        %427 = vxpose.xlu0.b32.cont [5/16] %v219, 128
        %428 = vxpose.xlu0.b32.cont [6/16] %v220, 128
        %429 = vxpose.xlu0.b32.cont [7/16] %v221, 128
        %430 = vxpose.xlu0.b32.cont [8/16] %v222, 128
        %431 = vxpose.xlu0.b32.cont [9/16] %v223, 128
        %432 = vxpose.xlu0.b32.cont [10/16] %v224, 128
        %433 = vxpose.xlu0.b32.cont [11/16] %v225, 128
        %434 = vxpose.xlu0.b32.cont [12/16] %v226, 128
        %435 = vxpose.xlu0.b32.cont [13/16] %v227, 128
        %436 = vxpose.xlu0.b32.cont [14/16] %v228, 128
        %437 = vxpose.xlu0.b32.cont [15/16] %v229, 128
        %438 = vxpose.xlu0.b32.end [16/16] %v230, 128
        %v439 = vpop.trf.xlu0
        %v440 = vpop.trf.xlu0
        %v441 = vpop.trf.xlu0
        %v442 = vpop.trf.xlu0
        %v443 = vpop.trf.xlu0
        %v444 = vpop.trf.xlu0
        %v445 = vpop.trf.xlu0
        %v446 = vpop.trf.xlu0
        %v447 = vpop.trf.xlu0
        %v448 = vpop.trf.xlu0
        %v449 = vpop.trf.xlu0
        %v450 = vpop.trf.xlu0
        %v451 = vpop.trf.xlu0
        %v452 = vpop.trf.xlu0
        %v453 = vpop.trf.xlu0
        %v454 = vpop.trf.xlu0
        %455 = vxpose.xlu0.b32.start [1/16] %v231, 128
        %456 = vxpose.xlu0.b32.cont [2/16] %v232, 128
        %457 = vxpose.xlu0.b32.cont [3/16] %v233, 128
        %458 = vxpose.xlu0.b32.cont [4/16] %v234, 128
        %459 = vxpose.xlu0.b32.cont [5/16] %v235, 128
        %460 = vxpose.xlu0.b32.cont [6/16] %v236, 128
        %461 = vxpose.xlu0.b32.cont [7/16] %v237, 128
        %462 = vxpose.xlu0.b32.cont [8/16] %v238, 128
        %463 = vxpose.xlu0.b32.cont [9/16] %v239, 128
        %464 = vxpose.xlu0.b32.cont [10/16] %v240, 128
        %465 = vxpose.xlu0.b32.cont [11/16] %v241, 128
        %466 = vxpose.xlu0.b32.cont [12/16] %v242, 128
        %467 = vxpose.xlu0.b32.cont [13/16] %v243, 128
        %468 = vxpose.xlu0.b32.cont [14/16] %v244, 128
        %469 = vxpose.xlu0.b32.cont [15/16] %v245, 128
        %470 = vxpose.xlu0.b32.end [16/16] %v246, 128
        %v471 = vpop.trf.xlu0
        %v472 = vpop.trf.xlu0
        %v473 = vpop.trf.xlu0
        %v474 = vpop.trf.xlu0
        %v475 = vpop.trf.xlu0
        %v476 = vpop.trf.xlu0
        %v477 = vpop.trf.xlu0
        %v478 = vpop.trf.xlu0
        %v479 = vpop.trf.xlu0
        %v480 = vpop.trf.xlu0
        %v481 = vpop.trf.xlu0
        %v482 = vpop.trf.xlu0
        %v483 = vpop.trf.xlu0
        %v484 = vpop.trf.xlu0
        %v485 = vpop.trf.xlu0
        %v486 = vpop.trf.xlu0
        %487 = vxpose.xlu0.b32.start [1/16] %v247, 128
        %488 = vxpose.xlu0.b32.cont [2/16] %v248, 128
        %489 = vxpose.xlu0.b32.cont [3/16] %v249, 128
        %490 = vxpose.xlu0.b32.cont [4/16] %v250, 128
        %491 = vxpose.xlu0.b32.cont [5/16] %v251, 128
        %492 = vxpose.xlu0.b32.cont [6/16] %v252, 128
        %493 = vxpose.xlu0.b32.cont [7/16] %v253, 128
        %494 = vxpose.xlu0.b32.cont [8/16] %v254, 128
        %495 = vxpose.xlu0.b32.cont [9/16] %v255, 128
        %496 = vxpose.xlu0.b32.cont [10/16] %v256, 128
        %497 = vxpose.xlu0.b32.cont [11/16] %v257, 128
        %498 = vxpose.xlu0.b32.cont [12/16] %v258, 128
        %499 = vxpose.xlu0.b32.cont [13/16] %v259, 128
        %500 = vxpose.xlu0.b32.cont [14/16] %v260, 128
        %501 = vxpose.xlu0.b32.cont [15/16] %v261, 128
        %502 = vxpose.xlu0.b32.end [16/16] %v262, 128
        %v503 = vpop.trf.xlu0
        %v504 = vpop.trf.xlu0
        %v505 = vpop.trf.xlu0
        %v506 = vpop.trf.xlu0
        %v507 = vpop.trf.xlu0
        %v508 = vpop.trf.xlu0
        %v509 = vpop.trf.xlu0
        %v510 = vpop.trf.xlu0
        %v511 = vpop.trf.xlu0
        %v512 = vpop.trf.xlu0
        %v513 = vpop.trf.xlu0
        %v514 = vpop.trf.xlu0
        %v515 = vpop.trf.xlu0
        %v516 = vpop.trf.xlu0
        %v517 = vpop.trf.xlu0
        %v518 = vpop.trf.xlu0
        %519 = vmatprep.subr.mxu0 0.0
        %520 = vmatpush1.msra.mxu0 %v135
        %521 = vmatprep.subr.mxu0 0.0
        %522 = vmatpush1.msra.mxu0 %v136
        %523 = vmatprep.subr.mxu0 0.0
        %524 = vmatpush1.msra.mxu0 %v137
        %525 = vmatprep.subr.mxu0 0.0
        %526 = vmatpush1.msra.mxu0 %v138
        %527 = vmatprep.subr.mxu0 0.0
        %528 = vmatpush1.msra.mxu0 %v139
        %529 = vmatprep.subr.mxu0 0.0
        %530 = vmatpush1.msra.mxu0 %v140
        %531 = vmatprep.subr.mxu0 0.0
        %532 = vmatpush1.msra.mxu0 %v141
        %533 = vmatprep.subr.mxu0 0.0
        %534 = vmatpush1.msra.mxu0 %v142
        %535 = vmatprep.subr.mxu0 0.0
        %536 = vmatpush1.msra.mxu0 %v143
        %537 = vmatprep.subr.mxu0 0.0
        %538 = vmatpush1.msra.mxu0 %v144
        %539 = vmatprep.subr.mxu0 0.0
        %540 = vmatpush1.msra.mxu0 %v145
        %541 = vmatprep.subr.mxu0 0.0
        %542 = vmatpush1.msra.mxu0 %v146
        %543 = vmatprep.subr.mxu0 0.0
        %544 = vmatpush1.msra.mxu0 %v147
        %545 = vmatprep.subr.mxu0 0.0
        %546 = vmatpush1.msra.mxu0 %v148
        %547 = vmatprep.subr.mxu0 0.0
        %548 = vmatpush1.msra.mxu0 %v149
        %549 = vmatprep.subr.mxu0 0.0
        %550 = vmatpush1.msra.mxu0 %v150
        %551 = vmatprep.subr.mxu0 0.0
        %552 = vmatpush1.msra.mxu0 %v151
        %553 = vmatprep.subr.mxu0 0.0
        %554 = vmatpush1.msra.mxu0 %v152
        %555 = vmatprep.subr.mxu0 0.0
        %556 = vmatpush1.msra.mxu0 %v153
        %557 = vmatprep.subr.mxu0 0.0
        %558 = vmatpush1.msra.mxu0 %v154
        %559 = vmatprep.subr.mxu0 0.0
        %560 = vmatpush1.msra.mxu0 %v155
        %561 = vmatprep.subr.mxu0 0.0
        %562 = vmatpush1.msra.mxu0 %v156
        %563 = vmatprep.subr.mxu0 0.0
        %564 = vmatpush1.msra.mxu0 %v157
        %565 = vmatprep.subr.mxu0 0.0
        %566 = vmatpush1.msra.mxu0 %v158
        %567 = vmatprep.subr.mxu0 0.0
        %568 = vmatpush1.msra.mxu0 %v159
        %569 = vmatprep.subr.mxu0 0.0
        %570 = vmatpush1.msra.mxu0 %v160
        %571 = vmatprep.subr.mxu0 0.0
        %572 = vmatpush1.msra.mxu0 %v161
        %573 = vmatprep.subr.mxu0 0.0
        %574 = vmatpush1.msra.mxu0 %v162
        %575 = vmatprep.subr.mxu0 0.0
        %576 = vmatpush1.msra.mxu0 %v163
        %577 = vmatprep.subr.mxu0 0.0
        %578 = vmatpush1.msra.mxu0 %v164
        %579 = vmatprep.subr.mxu0 0.0
        %580 = vmatpush1.msra.mxu0 %v165
        %581 = vmatprep.subr.mxu0 0.0
        %582 = vmatpush1.msra.mxu0 %v166
        %583 = vmatprep.mubr.f32.mxu0 %v311
        %584 = vmatmul.mubr.f32.gmra.mrb[0].mxu0 %v279
        %v585 = vpop.f32.mrb[0].mxu0
        %v586 = vadd.f32 0.0, %v585
        %v587 = vpop.f32.mrb[0].mxu0
        %588 = vmatprep.mubr.f32.mxu0 %v312
        %589 = vmatmul.mubr.f32.gmra.mrb[0].mxu0 %v280
        %v590 = vpop.f32.mrb[0].mxu0
        %v591 = vadd.f32 0.0, %v590
        %v592 = vpop.f32.mrb[0].mxu0
        %593 = vmatprep.mubr.f32.mxu0 %v313
        %594 = vmatmul.mubr.f32.gmra.mrb[0].mxu0 %v281
        %v595 = vpop.f32.mrb[0].mxu0
        %v596 = vadd.f32 0.0, %v595
        %v597 = vpop.f32.mrb[0].mxu0
        %598 = vmatprep.mubr.f32.mxu0 %v314
        %599 = vmatmul.mubr.f32.gmra.mrb[0].mxu0 %v282
        %v600 = vpop.f32.mrb[0].mxu0
        %v601 = vadd.f32 0.0, %v600
        %v602 = vpop.f32.mrb[0].mxu0
        %603 = vdwg.mxu0
        %604 = vmatprep.subr.mxu0 0.0
        %605 = vmatpush1.msra.mxu0 %v167
        %606 = vmatprep.subr.mxu0 0.0
        %607 = vmatpush1.msra.mxu0 %v168
        %608 = vmatprep.subr.mxu0 0.0
        %609 = vmatpush1.msra.mxu0 %v169
        %610 = vmatprep.subr.mxu0 0.0
        %611 = vmatpush1.msra.mxu0 %v170
        %612 = vmatprep.subr.mxu0 0.0
        %613 = vmatpush1.msra.mxu0 %v171
        %614 = vmatprep.subr.mxu0 0.0
        %615 = vmatpush1.msra.mxu0 %v172
        %616 = vmatprep.subr.mxu0 0.0
        %617 = vmatpush1.msra.mxu0 %v173
        %618 = vmatprep.subr.mxu0 0.0
        %619 = vmatpush1.msra.mxu0 %v174
        %620 = vmatprep.subr.mxu0 0.0
        %621 = vmatpush1.msra.mxu0 %v175
        %622 = vmatprep.subr.mxu0 0.0
        %623 = vmatpush1.msra.mxu0 %v176
        %624 = vmatprep.subr.mxu0 0.0
        %625 = vmatpush1.msra.mxu0 %v177
        %626 = vmatprep.subr.mxu0 0.0
        %627 = vmatpush1.msra.mxu0 %v178
        %628 = vmatprep.subr.mxu0 0.0
        %629 = vmatpush1.msra.mxu0 %v179
        %630 = vmatprep.subr.mxu0 0.0
        %631 = vmatpush1.msra.mxu0 %v180
        %632 = vmatprep.subr.mxu0 0.0
        %633 = vmatpush1.msra.mxu0 %v181
        %634 = vmatprep.subr.mxu0 0.0
        %635 = vmatpush1.msra.mxu0 %v182
        %636 = vmatprep.subr.mxu0 0.0
        %637 = vmatpush1.msra.mxu0 %v183
        %638 = vmatprep.subr.mxu0 0.0
        %639 = vmatpush1.msra.mxu0 %v184
        %640 = vmatprep.subr.mxu0 0.0
        %641 = vmatpush1.msra.mxu0 %v185
        %642 = vmatprep.subr.mxu0 0.0
        %643 = vmatpush1.msra.mxu0 %v186
        %644 = vmatprep.subr.mxu0 0.0
        %645 = vmatpush1.msra.mxu0 %v187
        %646 = vmatprep.subr.mxu0 0.0
        %647 = vmatpush1.msra.mxu0 %v188
        %648 = vmatprep.subr.mxu0 0.0
        %649 = vmatpush1.msra.mxu0 %v189
        %650 = vmatprep.subr.mxu0 0.0
        %651 = vmatpush1.msra.mxu0 %v190
        %652 = vmatprep.subr.mxu0 0.0
        %653 = vmatpush1.msra.mxu0 %v191
        %654 = vmatprep.subr.mxu0 0.0
        %655 = vmatpush1.msra.mxu0 %v192
        %656 = vmatprep.subr.mxu0 0.0
        %657 = vmatpush1.msra.mxu0 %v193
        %658 = vmatprep.subr.mxu0 0.0
        %659 = vmatpush1.msra.mxu0 %v194
        %660 = vmatprep.subr.mxu0 0.0
        %661 = vmatpush1.msra.mxu0 %v195
        %662 = vmatprep.subr.mxu0 0.0
        %663 = vmatpush1.msra.mxu0 %v196
        %664 = vmatprep.subr.mxu0 0.0
        %665 = vmatpush1.msra.mxu0 %v197
        %666 = vmatprep.subr.mxu0 0.0
        %667 = vmatpush1.msra.mxu0 %v198
        %668 = vmatprep.mubr.f32.mxu0 %v375
        %669 = vmatmul.mubr.f32.gmra.mrb[0].mxu0 %v343
        %v670 = vpop.f32.mrb[0].mxu0
        %v671 = vadd.f32 %v586, %v670
        %v672 = vpop.f32.mrb[0].mxu0
        %673 = vmatprep.mubr.f32.mxu0 %v376
        %674 = vmatmul.mubr.f32.gmra.mrb[0].mxu0 %v344
        %v675 = vpop.f32.mrb[0].mxu0
        %v676 = vadd.f32 %v591, %v675
        %v677 = vpop.f32.mrb[0].mxu0
        %678 = vmatprep.mubr.f32.mxu0 %v377
        %679 = vmatmul.mubr.f32.gmra.mrb[0].mxu0 %v345
        %v680 = vpop.f32.mrb[0].mxu0
        %v681 = vadd.f32 %v596, %v680
        %v682 = vpop.f32.mrb[0].mxu0
        %683 = vmatprep.mubr.f32.mxu0 %v378
        %684 = vmatmul.mubr.f32.gmra.mrb[0].mxu0 %v346
        %v685 = vpop.f32.mrb[0].mxu0
        %v686 = vadd.f32 %v601, %v685
        %v687 = vpop.f32.mrb[0].mxu0
        %688 = vdwg.mxu0
        %689 = vmatprep.subr.mxu0 0.0
        %690 = vmatpush1.msra.mxu0 %v199
        %691 = vmatprep.subr.mxu0 0.0
        %692 = vmatpush1.msra.mxu0 %v200
        %693 = vmatprep.subr.mxu0 0.0
        %694 = vmatpush1.msra.mxu0 %v201
        %695 = vmatprep.subr.mxu0 0.0
        %696 = vmatpush1.msra.mxu0 %v202
        %697 = vmatprep.subr.mxu0 0.0
        %698 = vmatpush1.msra.mxu0 %v203
        %699 = vmatprep.subr.mxu0 0.0
        %700 = vmatpush1.msra.mxu0 %v204
        %701 = vmatprep.subr.mxu0 0.0
        %702 = vmatpush1.msra.mxu0 %v205
        %703 = vmatprep.subr.mxu0 0.0
        %704 = vmatpush1.msra.mxu0 %v206
        %705 = vmatprep.subr.mxu0 0.0
        %706 = vmatpush1.msra.mxu0 %v207
        %707 = vmatprep.subr.mxu0 0.0
        %708 = vmatpush1.msra.mxu0 %v208
        %709 = vmatprep.subr.mxu0 0.0
        %710 = vmatpush1.msra.mxu0 %v209
        %711 = vmatprep.subr.mxu0 0.0
        %712 = vmatpush1.msra.mxu0 %v210
        %713 = vmatprep.subr.mxu0 0.0
        %714 = vmatpush1.msra.mxu0 %v211
        %715 = vmatprep.subr.mxu0 0.0
        %716 = vmatpush1.msra.mxu0 %v212
        %717 = vmatprep.subr.mxu0 0.0
        %718 = vmatpush1.msra.mxu0 %v213
        %719 = vmatprep.subr.mxu0 0.0
        %720 = vmatpush1.msra.mxu0 %v214
        %721 = vmatprep.subr.mxu0 0.0
        %722 = vmatpush1.msra.mxu0 %v215
        %723 = vmatprep.subr.mxu0 0.0
        %724 = vmatpush1.msra.mxu0 %v216
        %725 = vmatprep.subr.mxu0 0.0
        %726 = vmatpush1.msra.mxu0 %v217
        %727 = vmatprep.subr.mxu0 0.0
        %728 = vmatpush1.msra.mxu0 %v218
        %729 = vmatprep.subr.mxu0 0.0
        %730 = vmatpush1.msra.mxu0 %v219
        %731 = vmatprep.subr.mxu0 0.0
        %732 = vmatpush1.msra.mxu0 %v220
        %733 = vmatprep.subr.mxu0 0.0
        %734 = vmatpush1.msra.mxu0 %v221
        %735 = vmatprep.subr.mxu0 0.0
        %736 = vmatpush1.msra.mxu0 %v222
        %737 = vmatprep.subr.mxu0 0.0
        %738 = vmatpush1.msra.mxu0 %v223
        %739 = vmatprep.subr.mxu0 0.0
        %740 = vmatpush1.msra.mxu0 %v224
        %741 = vmatprep.subr.mxu0 0.0
        %742 = vmatpush1.msra.mxu0 %v225
        %743 = vmatprep.subr.mxu0 0.0
        %744 = vmatpush1.msra.mxu0 %v226
        %745 = vmatprep.subr.mxu0 0.0
        %746 = vmatpush1.msra.mxu0 %v227
        %747 = vmatprep.subr.mxu0 0.0
        %748 = vmatpush1.msra.mxu0 %v228
        %749 = vmatprep.subr.mxu0 0.0
        %750 = vmatpush1.msra.mxu0 %v229
        %751 = vmatprep.subr.mxu0 0.0
        %752 = vmatpush1.msra.mxu0 %v230
        %753 = vmatprep.mubr.f32.mxu0 %v439
        %754 = vmatmul.mubr.f32.gmra.mrb[0].mxu0 %v407
        %v755 = vpop.f32.mrb[0].mxu0
        %v756 = vadd.f32 %v671, %v755
        %v757 = vpop.f32.mrb[0].mxu0
        %758 = vmatprep.mubr.f32.mxu0 %v440
        %759 = vmatmul.mubr.f32.gmra.mrb[0].mxu0 %v408
        %v760 = vpop.f32.mrb[0].mxu0
        %v761 = vadd.f32 %v676, %v760
        %v762 = vpop.f32.mrb[0].mxu0
        %763 = vmatprep.mubr.f32.mxu0 %v441
        %764 = vmatmul.mubr.f32.gmra.mrb[0].mxu0 %v409
        %v765 = vpop.f32.mrb[0].mxu0
        %v766 = vadd.f32 %v681, %v765
        %v767 = vpop.f32.mrb[0].mxu0
        %768 = vmatprep.mubr.f32.mxu0 %v442
        %769 = vmatmul.mubr.f32.gmra.mrb[0].mxu0 %v410
        %v770 = vpop.f32.mrb[0].mxu0
        %v771 = vadd.f32 %v686, %v770
        %v772 = vpop.f32.mrb[0].mxu0
        %773 = vdwg.mxu0
        %774 = vmatprep.subr.mxu0 0.0
        %775 = vmatpush1.msra.mxu0 %v231
        %776 = vmatprep.subr.mxu0 0.0
        %777 = vmatpush1.msra.mxu0 %v232
        %778 = vmatprep.subr.mxu0 0.0
        %779 = vmatpush1.msra.mxu0 %v233
        %780 = vmatprep.subr.mxu0 0.0
        %781 = vmatpush1.msra.mxu0 %v234
        %782 = vmatprep.subr.mxu0 0.0
        %783 = vmatpush1.msra.mxu0 %v235
        %784 = vmatprep.subr.mxu0 0.0
        %785 = vmatpush1.msra.mxu0 %v236
        %786 = vmatprep.subr.mxu0 0.0
        %787 = vmatpush1.msra.mxu0 %v237
        %788 = vmatprep.subr.mxu0 0.0
        %789 = vmatpush1.msra.mxu0 %v238
        %790 = vmatprep.subr.mxu0 0.0
        %791 = vmatpush1.msra.mxu0 %v239
        %792 = vmatprep.subr.mxu0 0.0
        %793 = vmatpush1.msra.mxu0 %v240
        %794 = vmatprep.subr.mxu0 0.0
        %795 = vmatpush1.msra.mxu0 %v241
        %796 = vmatprep.subr.mxu0 0.0
        %797 = vmatpush1.msra.mxu0 %v242
        %798 = vmatprep.subr.mxu0 0.0
        %799 = vmatpush1.msra.mxu0 %v243
        %800 = vmatprep.subr.mxu0 0.0
        %801 = vmatpush1.msra.mxu0 %v244
        %802 = vmatprep.subr.mxu0 0.0
        %803 = vmatpush1.msra.mxu0 %v245
        %804 = vmatprep.subr.mxu0 0.0
        %805 = vmatpush1.msra.mxu0 %v246
        %806 = vmatprep.subr.mxu0 0.0
        %807 = vmatpush1.msra.mxu0 %v247
        %808 = vmatprep.subr.mxu0 0.0
        %809 = vmatpush1.msra.mxu0 %v248
        %810 = vmatprep.subr.mxu0 0.0
        %811 = vmatpush1.msra.mxu0 %v249
        %812 = vmatprep.subr.mxu0 0.0
        %813 = vmatpush1.msra.mxu0 %v250
        %814 = vmatprep.subr.mxu0 0.0
        %815 = vmatpush1.msra.mxu0 %v251
        %816 = vmatprep.subr.mxu0 0.0
        %817 = vmatpush1.msra.mxu0 %v252
        %818 = vmatprep.subr.mxu0 0.0
        %819 = vmatpush1.msra.mxu0 %v253
        %820 = vmatprep.subr.mxu0 0.0
        %821 = vmatpush1.msra.mxu0 %v254
        %822 = vmatprep.subr.mxu0 0.0
        %823 = vmatpush1.msra.mxu0 %v255
        %824 = vmatprep.subr.mxu0 0.0
        %825 = vmatpush1.msra.mxu0 %v256
        %826 = vmatprep.subr.mxu0 0.0
        %827 = vmatpush1.msra.mxu0 %v257
        %828 = vmatprep.subr.mxu0 0.0
        %829 = vmatpush1.msra.mxu0 %v258
        %830 = vmatprep.subr.mxu0 0.0
        %831 = vmatpush1.msra.mxu0 %v259
        %832 = vmatprep.subr.mxu0 0.0
        %833 = vmatpush1.msra.mxu0 %v260
        %834 = vmatprep.subr.mxu0 0.0
        %835 = vmatpush1.msra.mxu0 %v261
        %836 = vmatprep.subr.mxu0 0.0
        %837 = vmatpush1.msra.mxu0 %v262
        %838 = vmatprep.mubr.f32.mxu0 %v503
        %839 = vmatmul.mubr.f32.gmra.mrb[0].mxu0 %v471
        %v840 = vpop.f32.mrb[0].mxu0
        %v841 = vadd.f32 %v756, %v840
        %v842 = vpop.f32.mrb[0].mxu0
        %843 = vmatprep.mubr.f32.mxu0 %v504
        %844 = vmatmul.mubr.f32.gmra.mrb[0].mxu0 %v472
        %v845 = vpop.f32.mrb[0].mxu0
        %v846 = vadd.f32 %v761, %v845
        %v847 = vpop.f32.mrb[0].mxu0
        %848 = vmatprep.mubr.f32.mxu0 %v505
        %849 = vmatmul.mubr.f32.gmra.mrb[0].mxu0 %v473
        %v850 = vpop.f32.mrb[0].mxu0
        %v851 = vadd.f32 %v766, %v850
        %v852 = vpop.f32.mrb[0].mxu0
        %853 = vmatprep.mubr.f32.mxu0 %v506
        %854 = vmatmul.mubr.f32.gmra.mrb[0].mxu0 %v474
        %v855 = vpop.f32.mrb[0].mxu0
        %v856 = vadd.f32 %v771, %v855
        %v857 = vpop.f32.mrb[0].mxu0
        %858 = vdwg.mxu0
        %vm859 = vcmask 261120
        %v860 = vsel %vm859, %v841, -inf
        %861 = vmax.xlane.f32.xlu0 %v860
        %v862 = vpop.xlane.xlu0 %861
        %v863 = vsel %vm859, %v846, -inf
        %864 = vmax.xlane.f32.xlu0 %v863
        %v865 = vpop.xlane.xlu0 %864
        %v866 = vsel %vm859, %v851, -inf
        %867 = vmax.xlane.f32.xlu0 %v866
        %v868 = vpop.xlane.xlu0 %867
        %v869 = vsel %vm859, %v856, -inf
        %870 = vmax.xlane.f32.xlu0 %v869
        %v871 = vpop.xlane.xlu0 %870
        %v872 = vsub.f32 %v841, %v862
        %v873 = vsub.f32 %v846, %v865
        %v874 = vsub.f32 %v851, %v868
        %v875 = vsub.f32 %v856, %v871
        %v876 = vmul.f32 %v872, 1.442695
        %v877 = vpow.pop %v876
        %v878 = vmul.f32 %v873, 1.442695
        %v879 = vpow.pop %v878
        %v880 = vmul.f32 %v874, 1.442695
        %v881 = vpow.pop %v880
        %v882 = vmul.f32 %v875, 1.442695
        %v883 = vpow.pop %v882
        %v884 = vsel %vm859, %v877, 0.0
        %885 = vadd.xlane.f32.xlu0 %v884
        %v886 = vpop.xlane.xlu0 %885
        %v887 = vsel %vm859, %v879, 0.0
        %888 = vadd.xlane.f32.xlu0 %v887
        %v889 = vpop.xlane.xlu0 %888
        %v890 = vsel %vm859, %v881, 0.0
        %891 = vadd.xlane.f32.xlu0 %v890
        %v892 = vpop.xlane.xlu0 %891
        %v893 = vsel %vm859, %v883, 0.0
        %894 = vadd.xlane.f32.xlu0 %v893
        %v895 = vpop.xlane.xlu0 %894
        %v896 = vrcp.pop %v886
        %v897 = vmul.f32 %v877, %v896
        %v898 = vrcp.pop %v889
        %v899 = vmul.f32 %v879, %v898
        %v900 = vrcp.pop %v892
        %v901 = vmul.f32 %v881, %v900
        %v902 = vrcp.pop %v895
        %v903 = vmul.f32 %v883, %v902
        %v905 = vsel %vm859, %v135, 0
        %v908 = vsel %vm859, %v136, 0
        %v911 = vsel %vm859, %v137, 0
        %v914 = vsel %vm859, %v138, 0
        %v917 = vsel %vm859, %v139, 0
        %v920 = vsel %vm859, %v140, 0
        %v923 = vsel %vm859, %v141, 0
        %v926 = vsel %vm859, %v142, 0
        %v929 = vsel %vm859, %v143, 0
        %v932 = vsel %vm859, %v144, 0
        %v935 = vsel %vm859, %v145, 0
        %v938 = vsel %vm859, %v146, 0
        %v941 = vsel %vm859, %v147, 0
        %v944 = vsel %vm859, %v148, 0
        %v947 = vsel %vm859, %v149, 0
        %v950 = vsel %vm859, %v150, 0
        %v953 = vsel %vm859, %v151, 0
        %v956 = vsel %vm859, %v152, 0
        %v959 = vsel %vm859, %v153, 0
        %v962 = vsel %vm859, %v154, 0
        %v965 = vsel %vm859, %v155, 0
        %v968 = vsel %vm859, %v156, 0
        %v971 = vsel %vm859, %v157, 0
        %v974 = vsel %vm859, %v158, 0
        %v977 = vsel %vm859, %v159, 0
        %v980 = vsel %vm859, %v160, 0
        %v983 = vsel %vm859, %v161, 0
        %v986 = vsel %vm859, %v162, 0
        %v989 = vsel %vm859, %v163, 0
        %v992 = vsel %vm859, %v164, 0
        %v995 = vsel %vm859, %v165, 0
        %v998 = vsel %vm859, %v166, 0
        %v1001 = vsel %vm859, %v167, 0
        %v1004 = vsel %vm859, %v168, 0
        %v1007 = vsel %vm859, %v169, 0
        %v1010 = vsel %vm859, %v170, 0
        %v1013 = vsel %vm859, %v171, 0
        %v1016 = vsel %vm859, %v172, 0
        %v1019 = vsel %vm859, %v173, 0
        %v1022 = vsel %vm859, %v174, 0
        %v1025 = vsel %vm859, %v175, 0
        %v1028 = vsel %vm859, %v176, 0
        %v1031 = vsel %vm859, %v177, 0
        %v1034 = vsel %vm859, %v178, 0
        %v1037 = vsel %vm859, %v179, 0
        %v1040 = vsel %vm859, %v180, 0
        %v1043 = vsel %vm859, %v181, 0
        %v1046 = vsel %vm859, %v182, 0
        %v1049 = vsel %vm859, %v183, 0
        %v1052 = vsel %vm859, %v184, 0
        %v1055 = vsel %vm859, %v185, 0
        %v1058 = vsel %vm859, %v186, 0
        %v1061 = vsel %vm859, %v187, 0
        %v1064 = vsel %vm859, %v188, 0
        %v1067 = vsel %vm859, %v189, 0
        %v1070 = vsel %vm859, %v190, 0
        %v1073 = vsel %vm859, %v191, 0
        %v1076 = vsel %vm859, %v192, 0
        %v1079 = vsel %vm859, %v193, 0
        %v1082 = vsel %vm859, %v194, 0
        %v1085 = vsel %vm859, %v195, 0
        %v1088 = vsel %vm859, %v196, 0
        %v1091 = vsel %vm859, %v197, 0
        %v1094 = vsel %vm859, %v198, 0
        %v1097 = vsel %vm859, %v199, 0
        %v1100 = vsel %vm859, %v200, 0
        %v1103 = vsel %vm859, %v201, 0
        %v1106 = vsel %vm859, %v202, 0
        %v1109 = vsel %vm859, %v203, 0
        %v1112 = vsel %vm859, %v204, 0
        %v1115 = vsel %vm859, %v205, 0
        %v1118 = vsel %vm859, %v206, 0
        %v1121 = vsel %vm859, %v207, 0
        %v1124 = vsel %vm859, %v208, 0
        %v1127 = vsel %vm859, %v209, 0
        %v1130 = vsel %vm859, %v210, 0
        %v1133 = vsel %vm859, %v211, 0
        %v1136 = vsel %vm859, %v212, 0
        %v1139 = vsel %vm859, %v213, 0
        %v1142 = vsel %vm859, %v214, 0
        %v1145 = vsel %vm859, %v215, 0
        %v1148 = vsel %vm859, %v216, 0
        %v1151 = vsel %vm859, %v217, 0
        %v1154 = vsel %vm859, %v218, 0
        %v1157 = vsel %vm859, %v219, 0
        %v1160 = vsel %vm859, %v220, 0
        %v1163 = vsel %vm859, %v221, 0
        %v1166 = vsel %vm859, %v222, 0
        %v1169 = vsel %vm859, %v223, 0
        %v1172 = vsel %vm859, %v224, 0
        %v1175 = vsel %vm859, %v225, 0
        %v1178 = vsel %vm859, %v226, 0
        %v1181 = vsel %vm859, %v227, 0
        %v1184 = vsel %vm859, %v228, 0
        %v1187 = vsel %vm859, %v229, 0
        %v1190 = vsel %vm859, %v230, 0
        %v1193 = vsel %vm859, %v231, 0
        %v1196 = vsel %vm859, %v232, 0
        %v1199 = vsel %vm859, %v233, 0
        %v1202 = vsel %vm859, %v234, 0
        %v1205 = vsel %vm859, %v235, 0
        %v1208 = vsel %vm859, %v236, 0
        %v1211 = vsel %vm859, %v237, 0
        %v1214 = vsel %vm859, %v238, 0
        %v1217 = vsel %vm859, %v239, 0
        %v1220 = vsel %vm859, %v240, 0
        %v1223 = vsel %vm859, %v241, 0
        %v1226 = vsel %vm859, %v242, 0
        %v1229 = vsel %vm859, %v243, 0
        %v1232 = vsel %vm859, %v244, 0
        %v1235 = vsel %vm859, %v245, 0
        %v1238 = vsel %vm859, %v246, 0
        %v1241 = vsel %vm859, %v247, 0
        %v1244 = vsel %vm859, %v248, 0
        %v1247 = vsel %vm859, %v249, 0
        %v1250 = vsel %vm859, %v250, 0
        %v1253 = vsel %vm859, %v251, 0
        %v1256 = vsel %vm859, %v252, 0
        %v1259 = vsel %vm859, %v253, 0
        %v1262 = vsel %vm859, %v254, 0
        %v1265 = vsel %vm859, %v255, 0
        %v1268 = vsel %vm859, %v256, 0
        %v1271 = vsel %vm859, %v257, 0
        %v1274 = vsel %vm859, %v258, 0
        %v1277 = vsel %vm859, %v259, 0
        %v1280 = vsel %vm859, %v260, 0
        %v1283 = vsel %vm859, %v261, 0
        %v1286 = vsel %vm859, %v262, 0
        %1288 = vmatprep.subr.mxu0 0.0
        %1289 = vmatpush1.msra.mxu0 %v897
        %1290 = vmatprep.subr.mxu0 0.0
        %1291 = vmatpush1.msra.mxu0 %v899
        %1292 = vmatprep.subr.mxu0 0.0
        %1293 = vmatpush1.msra.mxu0 %v901
        %1294 = vmatprep.subr.mxu0 0.0
        %1295 = vmatpush1.msra.mxu0 %v903
        %1296 = vmatprep.subr.mxu0 0.0
        %1297 = vmatpush1.msra.mxu0 0.0
        %1298 = vmatprep.subr.mxu0 0.0
        %1299 = vmatpush1.msra.mxu0 0.0
        %1300 = vmatprep.subr.mxu0 0.0
        %1301 = vmatpush1.msra.mxu0 0.0
        %1302 = vmatprep.subr.mxu0 0.0
        %1303 = vmatpush1.msra.mxu0 0.0
        %1304 = vmatprep.subr.mxu0 0.0
        %1305 = vmatpush1.msra.mxu0 0.0
        %1306 = vmatprep.subr.mxu0 0.0
        %1307 = vmatpush1.msra.mxu0 0.0
        %1308 = vmatprep.subr.mxu0 0.0
        %1309 = vmatpush1.msra.mxu0 0.0
        %1310 = vmatprep.subr.mxu0 0.0
        %1311 = vmatpush1.msra.mxu0 0.0
        %1312 = vmatprep.subr.mxu0 0.0
        %1313 = vmatpush1.msra.mxu0 0.0
        %1314 = vmatprep.subr.mxu0 0.0
        %1315 = vmatpush1.msra.mxu0 0.0
        %1316 = vmatprep.subr.mxu0 0.0
        %1317 = vmatpush1.msra.mxu0 0.0
        %1318 = vmatprep.subr.mxu0 0.0
        %1319 = vmatpush1.msra.mxu0 0.0
        %1320 = vmatprep.subr.mxu0 0.0
        %1321 = vmatpush1.msra.mxu0 0.0
        %1322 = vmatprep.subr.mxu0 0.0
        %1323 = vmatpush1.msra.mxu0 0.0
        %1324 = vmatprep.subr.mxu0 0.0
        %1325 = vmatpush1.msra.mxu0 0.0
        %1326 = vmatprep.subr.mxu0 0.0
        %1327 = vmatpush1.msra.mxu0 0.0
        %1328 = vmatprep.subr.mxu0 0.0
        %1329 = vmatpush1.msra.mxu0 0.0
        %1330 = vmatprep.subr.mxu0 0.0
        %1331 = vmatpush1.msra.mxu0 0.0
        %1332 = vmatprep.subr.mxu0 0.0
        %1333 = vmatpush1.msra.mxu0 0.0
        %1334 = vmatprep.subr.mxu0 0.0
        %1335 = vmatpush1.msra.mxu0 0.0
        %1336 = vmatprep.subr.mxu0 0.0
        %1337 = vmatpush1.msra.mxu0 0.0
        %1338 = vmatprep.subr.mxu0 0.0
        %1339 = vmatpush1.msra.mxu0 0.0
        %1340 = vmatprep.subr.mxu0 0.0
        %1341 = vmatpush1.msra.mxu0 0.0
        %1342 = vmatprep.subr.mxu0 0.0
        %1343 = vmatpush1.msra.mxu0 0.0
        %1344 = vmatprep.subr.mxu0 0.0
        %1345 = vmatpush1.msra.mxu0 0.0
        %1346 = vmatprep.subr.mxu0 0.0
        %1347 = vmatpush1.msra.mxu0 0.0
        %1348 = vmatprep.subr.mxu0 0.0
        %1349 = vmatpush1.msra.mxu0 0.0
        %1350 = vmatprep.subr.mxu0 0.0
        %1351 = vmatpush1.msra.mxu0 0.0
        %1352 = vmatprep.mubr.f32.mxu0 0.0
        %1353 = vmatmul.mubr.f32.gmra.mrb[0].mxu0 %v905
        %v1354 = vpop.f32.mrb[0].mxu0
        %v1355 = vadd.f32 0.0, %v1354
        %v1356 = vpop.f32.mrb[0].mxu0
        %1357 = vmatprep.mubr.f32.mxu0 0.0
        %1358 = vmatmul.mubr.f32.gmra.mrb[0].mxu0 %v908
        %v1359 = vpop.f32.mrb[0].mxu0
        %v1360 = vadd.f32 0.0, %v1359
        %v1361 = vpop.f32.mrb[0].mxu0
        %1362 = vmatprep.mubr.f32.mxu0 0.0
        %1363 = vmatmul.mubr.f32.gmra.mrb[0].mxu0 %v911
        %v1364 = vpop.f32.mrb[0].mxu0
        %v1365 = vadd.f32 0.0, %v1364
        %v1366 = vpop.f32.mrb[0].mxu0
        %1367 = vmatprep.mubr.f32.mxu0 0.0
        %1368 = vmatmul.mubr.f32.gmra.mrb[0].mxu0 %v914
        %v1369 = vpop.f32.mrb[0].mxu0
        %v1370 = vadd.f32 0.0, %v1369
        %v1371 = vpop.f32.mrb[0].mxu0
        %1372 = vmatprep.mubr.f32.mxu0 0.0
        %1373 = vmatmul.mubr.f32.gmra.mrb[0].mxu0 %v917
        %v1374 = vpop.f32.mrb[0].mxu0
        %v1375 = vadd.f32 0.0, %v1374
        %v1376 = vpop.f32.mrb[0].mxu0
        %1377 = vmatprep.mubr.f32.mxu0 0.0
        %1378 = vmatmul.mubr.f32.gmra.mrb[0].mxu0 %v920
        %v1379 = vpop.f32.mrb[0].mxu0
        %v1380 = vadd.f32 0.0, %v1379
        %v1381 = vpop.f32.mrb[0].mxu0
        %1382 = vmatprep.mubr.f32.mxu0 0.0
        %1383 = vmatmul.mubr.f32.gmra.mrb[0].mxu0 %v923
        %v1384 = vpop.f32.mrb[0].mxu0
        %v1385 = vadd.f32 0.0, %v1384
        %v1386 = vpop.f32.mrb[0].mxu0
        %1387 = vmatprep.mubr.f32.mxu0 0.0
        %1388 = vmatmul.mubr.f32.gmra.mrb[0].mxu0 %v926
        %v1389 = vpop.f32.mrb[0].mxu0
        %v1390 = vadd.f32 0.0, %v1389
        %v1391 = vpop.f32.mrb[0].mxu0
        %1392 = vmatprep.mubr.f32.mxu0 0.0
        %1393 = vmatmul.mubr.f32.gmra.mrb[0].mxu0 %v929
        %v1394 = vpop.f32.mrb[0].mxu0
        %v1395 = vadd.f32 0.0, %v1394
        %v1396 = vpop.f32.mrb[0].mxu0
        %1397 = vmatprep.mubr.f32.mxu0 0.0
        %1398 = vmatmul.mubr.f32.gmra.mrb[0].mxu0 %v932
        %v1399 = vpop.f32.mrb[0].mxu0
        %v1400 = vadd.f32 0.0, %v1399
        %v1401 = vpop.f32.mrb[0].mxu0
        %1402 = vmatprep.mubr.f32.mxu0 0.0
        %1403 = vmatmul.mubr.f32.gmra.mrb[0].mxu0 %v935
        %v1404 = vpop.f32.mrb[0].mxu0
        %v1405 = vadd.f32 0.0, %v1404
        %v1406 = vpop.f32.mrb[0].mxu0
        %1407 = vmatprep.mubr.f32.mxu0 0.0
        %1408 = vmatmul.mubr.f32.gmra.mrb[0].mxu0 %v938
        %v1409 = vpop.f32.mrb[0].mxu0
        %v1410 = vadd.f32 0.0, %v1409
        %v1411 = vpop.f32.mrb[0].mxu0
        %1412 = vmatprep.mubr.f32.mxu0 0.0
        %1413 = vmatmul.mubr.f32.gmra.mrb[0].mxu0 %v941
        %v1414 = vpop.f32.mrb[0].mxu0
        %v1415 = vadd.f32 0.0, %v1414
        %v1416 = vpop.f32.mrb[0].mxu0
        %1417 = vmatprep.mubr.f32.mxu0 0.0
        %1418 = vmatmul.mubr.f32.gmra.mrb[0].mxu0 %v944
        %v1419 = vpop.f32.mrb[0].mxu0
        %v1420 = vadd.f32 0.0, %v1419
        %v1421 = vpop.f32.mrb[0].mxu0
        %1422 = vmatprep.mubr.f32.mxu0 0.0
        %1423 = vmatmul.mubr.f32.gmra.mrb[0].mxu0 %v947
        %v1424 = vpop.f32.mrb[0].mxu0
        %v1425 = vadd.f32 0.0, %v1424
        %v1426 = vpop.f32.mrb[0].mxu0
        %1427 = vmatprep.mubr.f32.mxu0 0.0
        %1428 = vmatmul.mubr.f32.gmra.mrb[0].mxu0 %v950
        %v1429 = vpop.f32.mrb[0].mxu0
        %v1430 = vadd.f32 0.0, %v1429
        %v1431 = vpop.f32.mrb[0].mxu0
        %1432 = vmatprep.mubr.f32.mxu0 0.0
        %1433 = vmatmul.mubr.f32.gmra.mrb[0].mxu0 %v953
        %v1434 = vpop.f32.mrb[0].mxu0
        %v1435 = vadd.f32 0.0, %v1434
        %v1436 = vpop.f32.mrb[0].mxu0
        %1437 = vmatprep.mubr.f32.mxu0 0.0
        %1438 = vmatmul.mubr.f32.gmra.mrb[0].mxu0 %v956
        %v1439 = vpop.f32.mrb[0].mxu0
        %v1440 = vadd.f32 0.0, %v1439
        %v1441 = vpop.f32.mrb[0].mxu0
        %1442 = vmatprep.mubr.f32.mxu0 0.0
        %1443 = vmatmul.mubr.f32.gmra.mrb[0].mxu0 %v959
        %v1444 = vpop.f32.mrb[0].mxu0
        %v1445 = vadd.f32 0.0, %v1444
        %v1446 = vpop.f32.mrb[0].mxu0
        %1447 = vmatprep.mubr.f32.mxu0 0.0
        %1448 = vmatmul.mubr.f32.gmra.mrb[0].mxu0 %v962
        %v1449 = vpop.f32.mrb[0].mxu0
        %v1450 = vadd.f32 0.0, %v1449
        %v1451 = vpop.f32.mrb[0].mxu0
        %1452 = vmatprep.mubr.f32.mxu0 0.0
        %1453 = vmatmul.mubr.f32.gmra.mrb[0].mxu0 %v965
        %v1454 = vpop.f32.mrb[0].mxu0
        %v1455 = vadd.f32 0.0, %v1454
        %v1456 = vpop.f32.mrb[0].mxu0
        %1457 = vmatprep.mubr.f32.mxu0 0.0
        %1458 = vmatmul.mubr.f32.gmra.mrb[0].mxu0 %v968
        %v1459 = vpop.f32.mrb[0].mxu0
        %v1460 = vadd.f32 0.0, %v1459
        %v1461 = vpop.f32.mrb[0].mxu0
        %1462 = vmatprep.mubr.f32.mxu0 0.0
        %1463 = vmatmul.mubr.f32.gmra.mrb[0].mxu0 %v971
        %v1464 = vpop.f32.mrb[0].mxu0
        %v1465 = vadd.f32 0.0, %v1464
        %v1466 = vpop.f32.mrb[0].mxu0
        %1467 = vmatprep.mubr.f32.mxu0 0.0
        %1468 = vmatmul.mubr.f32.gmra.mrb[0].mxu0 %v974
        %v1469 = vpop.f32.mrb[0].mxu0
        %v1470 = vadd.f32 0.0, %v1469
        %v1471 = vpop.f32.mrb[0].mxu0
        %1472 = vmatprep.mubr.f32.mxu0 0.0
        %1473 = vmatmul.mubr.f32.gmra.mrb[0].mxu0 %v977
        %v1474 = vpop.f32.mrb[0].mxu0
        %v1475 = vadd.f32 0.0, %v1474
        %v1476 = vpop.f32.mrb[0].mxu0
        %1477 = vmatprep.mubr.f32.mxu0 0.0
        %1478 = vmatmul.mubr.f32.gmra.mrb[0].mxu0 %v980
        %v1479 = vpop.f32.mrb[0].mxu0
        %v1480 = vadd.f32 0.0, %v1479
        %v1481 = vpop.f32.mrb[0].mxu0
        %1482 = vmatprep.mubr.f32.mxu0 0.0
        %1483 = vmatmul.mubr.f32.gmra.mrb[0].mxu0 %v983
        %v1484 = vpop.f32.mrb[0].mxu0
        %v1485 = vadd.f32 0.0, %v1484
        %v1486 = vpop.f32.mrb[0].mxu0
        %1487 = vmatprep.mubr.f32.mxu0 0.0
        %1488 = vmatmul.mubr.f32.gmra.mrb[0].mxu0 %v986
        %v1489 = vpop.f32.mrb[0].mxu0
        %v1490 = vadd.f32 0.0, %v1489
        %v1491 = vpop.f32.mrb[0].mxu0
        %1492 = vmatprep.mubr.f32.mxu0 0.0
        %1493 = vmatmul.mubr.f32.gmra.mrb[0].mxu0 %v989
        %v1494 = vpop.f32.mrb[0].mxu0
        %v1495 = vadd.f32 0.0, %v1494
        %v1496 = vpop.f32.mrb[0].mxu0
        %1497 = vmatprep.mubr.f32.mxu0 0.0
        %1498 = vmatmul.mubr.f32.gmra.mrb[0].mxu0 %v992
        %v1499 = vpop.f32.mrb[0].mxu0
        %v1500 = vadd.f32 0.0, %v1499
        %v1501 = vpop.f32.mrb[0].mxu0
        %1502 = vmatprep.mubr.f32.mxu0 0.0
        %1503 = vmatmul.mubr.f32.gmra.mrb[0].mxu0 %v995
        %v1504 = vpop.f32.mrb[0].mxu0
        %v1505 = vadd.f32 0.0, %v1504
        %v1506 = vpop.f32.mrb[0].mxu0
        %1507 = vmatprep.mubr.f32.mxu0 0.0
        %1508 = vmatmul.mubr.f32.gmra.mrb[0].mxu0 %v998
        %v1509 = vpop.f32.mrb[0].mxu0
        %v1510 = vadd.f32 0.0, %v1509
        %v1511 = vpop.f32.mrb[0].mxu0
        %1512 = vmatprep.mubr.f32.mxu0 0.0
        %1513 = vmatmul.mubr.f32.gmra.mrb[0].mxu0 %v1001
        %v1514 = vpop.f32.mrb[0].mxu0
        %v1515 = vadd.f32 0.0, %v1514
        %v1516 = vpop.f32.mrb[0].mxu0
        %1517 = vmatprep.mubr.f32.mxu0 0.0
        %1518 = vmatmul.mubr.f32.gmra.mrb[0].mxu0 %v1004
        %v1519 = vpop.f32.mrb[0].mxu0
        %v1520 = vadd.f32 0.0, %v1519
        %v1521 = vpop.f32.mrb[0].mxu0
        %1522 = vmatprep.mubr.f32.mxu0 0.0
        %1523 = vmatmul.mubr.f32.gmra.mrb[0].mxu0 %v1007
        %v1524 = vpop.f32.mrb[0].mxu0
        %v1525 = vadd.f32 0.0, %v1524
        %v1526 = vpop.f32.mrb[0].mxu0
        %1527 = vmatprep.mubr.f32.mxu0 0.0
        %1528 = vmatmul.mubr.f32.gmra.mrb[0].mxu0 %v1010
        %v1529 = vpop.f32.mrb[0].mxu0
        %v1530 = vadd.f32 0.0, %v1529
        %v1531 = vpop.f32.mrb[0].mxu0
        %1532 = vmatprep.mubr.f32.mxu0 0.0
        %1533 = vmatmul.mubr.f32.gmra.mrb[0].mxu0 %v1013
        %v1534 = vpop.f32.mrb[0].mxu0
        %v1535 = vadd.f32 0.0, %v1534
        %v1536 = vpop.f32.mrb[0].mxu0
        %1537 = vmatprep.mubr.f32.mxu0 0.0
        %1538 = vmatmul.mubr.f32.gmra.mrb[0].mxu0 %v1016
        %v1539 = vpop.f32.mrb[0].mxu0
        %v1540 = vadd.f32 0.0, %v1539
        %v1541 = vpop.f32.mrb[0].mxu0
        %1542 = vmatprep.mubr.f32.mxu0 0.0
        %1543 = vmatmul.mubr.f32.gmra.mrb[0].mxu0 %v1019
        %v1544 = vpop.f32.mrb[0].mxu0
        %v1545 = vadd.f32 0.0, %v1544
        %v1546 = vpop.f32.mrb[0].mxu0
        %1547 = vmatprep.mubr.f32.mxu0 0.0
        %1548 = vmatmul.mubr.f32.gmra.mrb[0].mxu0 %v1022
        %v1549 = vpop.f32.mrb[0].mxu0
        %v1550 = vadd.f32 0.0, %v1549
        %v1551 = vpop.f32.mrb[0].mxu0
        %1552 = vmatprep.mubr.f32.mxu0 0.0
        %1553 = vmatmul.mubr.f32.gmra.mrb[0].mxu0 %v1025
        %v1554 = vpop.f32.mrb[0].mxu0
        %v1555 = vadd.f32 0.0, %v1554
        %v1556 = vpop.f32.mrb[0].mxu0
        %1557 = vmatprep.mubr.f32.mxu0 0.0
        %1558 = vmatmul.mubr.f32.gmra.mrb[0].mxu0 %v1028
        %v1559 = vpop.f32.mrb[0].mxu0
        %v1560 = vadd.f32 0.0, %v1559
        %v1561 = vpop.f32.mrb[0].mxu0
        %1562 = vmatprep.mubr.f32.mxu0 0.0
        %1563 = vmatmul.mubr.f32.gmra.mrb[0].mxu0 %v1031
        %v1564 = vpop.f32.mrb[0].mxu0
        %v1565 = vadd.f32 0.0, %v1564
        %v1566 = vpop.f32.mrb[0].mxu0
        %1567 = vmatprep.mubr.f32.mxu0 0.0
        %1568 = vmatmul.mubr.f32.gmra.mrb[0].mxu0 %v1034
        %v1569 = vpop.f32.mrb[0].mxu0
        %v1570 = vadd.f32 0.0, %v1569
        %v1571 = vpop.f32.mrb[0].mxu0
        %1572 = vmatprep.mubr.f32.mxu0 0.0
        %1573 = vmatmul.mubr.f32.gmra.mrb[0].mxu0 %v1037
        %v1574 = vpop.f32.mrb[0].mxu0
        %v1575 = vadd.f32 0.0, %v1574
        %v1576 = vpop.f32.mrb[0].mxu0
        %1577 = vmatprep.mubr.f32.mxu0 0.0
        %1578 = vmatmul.mubr.f32.gmra.mrb[0].mxu0 %v1040
        %v1579 = vpop.f32.mrb[0].mxu0
        %v1580 = vadd.f32 0.0, %v1579
        %v1581 = vpop.f32.mrb[0].mxu0
        %1582 = vmatprep.mubr.f32.mxu0 0.0
        %1583 = vmatmul.mubr.f32.gmra.mrb[0].mxu0 %v1043
        %v1584 = vpop.f32.mrb[0].mxu0
        %v1585 = vadd.f32 0.0, %v1584
        %v1586 = vpop.f32.mrb[0].mxu0
        %1587 = vmatprep.mubr.f32.mxu0 0.0
        %1588 = vmatmul.mubr.f32.gmra.mrb[0].mxu0 %v1046
        %v1589 = vpop.f32.mrb[0].mxu0
        %v1590 = vadd.f32 0.0, %v1589
        %v1591 = vpop.f32.mrb[0].mxu0
        %1592 = vmatprep.mubr.f32.mxu0 0.0
        %1593 = vmatmul.mubr.f32.gmra.mrb[0].mxu0 %v1049
        %v1594 = vpop.f32.mrb[0].mxu0
        %v1595 = vadd.f32 0.0, %v1594
        %v1596 = vpop.f32.mrb[0].mxu0
        %1597 = vmatprep.mubr.f32.mxu0 0.0
        %1598 = vmatmul.mubr.f32.gmra.mrb[0].mxu0 %v1052
        %v1599 = vpop.f32.mrb[0].mxu0
        %v1600 = vadd.f32 0.0, %v1599
        %v1601 = vpop.f32.mrb[0].mxu0
        %1602 = vmatprep.mubr.f32.mxu0 0.0
        %1603 = vmatmul.mubr.f32.gmra.mrb[0].mxu0 %v1055
        %v1604 = vpop.f32.mrb[0].mxu0
        %v1605 = vadd.f32 0.0, %v1604
        %v1606 = vpop.f32.mrb[0].mxu0
        %1607 = vmatprep.mubr.f32.mxu0 0.0
        %1608 = vmatmul.mubr.f32.gmra.mrb[0].mxu0 %v1058
        %v1609 = vpop.f32.mrb[0].mxu0
        %v1610 = vadd.f32 0.0, %v1609
        %v1611 = vpop.f32.mrb[0].mxu0
        %1612 = vmatprep.mubr.f32.mxu0 0.0
        %1613 = vmatmul.mubr.f32.gmra.mrb[0].mxu0 %v1061
        %v1614 = vpop.f32.mrb[0].mxu0
        %v1615 = vadd.f32 0.0, %v1614
        %v1616 = vpop.f32.mrb[0].mxu0
        %1617 = vmatprep.mubr.f32.mxu0 0.0
        %1618 = vmatmul.mubr.f32.gmra.mrb[0].mxu0 %v1064
        %v1619 = vpop.f32.mrb[0].mxu0
        %v1620 = vadd.f32 0.0, %v1619
        %v1621 = vpop.f32.mrb[0].mxu0
        %1622 = vmatprep.mubr.f32.mxu0 0.0
        %1623 = vmatmul.mubr.f32.gmra.mrb[0].mxu0 %v1067
        %v1624 = vpop.f32.mrb[0].mxu0
        %v1625 = vadd.f32 0.0, %v1624
        %v1626 = vpop.f32.mrb[0].mxu0
        %1627 = vmatprep.mubr.f32.mxu0 0.0
        %1628 = vmatmul.mubr.f32.gmra.mrb[0].mxu0 %v1070
        %v1629 = vpop.f32.mrb[0].mxu0
        %v1630 = vadd.f32 0.0, %v1629
        %v1631 = vpop.f32.mrb[0].mxu0
        %1632 = vmatprep.mubr.f32.mxu0 0.0
        %1633 = vmatmul.mubr.f32.gmra.mrb[0].mxu0 %v1073
        %v1634 = vpop.f32.mrb[0].mxu0
        %v1635 = vadd.f32 0.0, %v1634
        %v1636 = vpop.f32.mrb[0].mxu0
        %1637 = vmatprep.mubr.f32.mxu0 0.0
        %1638 = vmatmul.mubr.f32.gmra.mrb[0].mxu0 %v1076
        %v1639 = vpop.f32.mrb[0].mxu0
        %v1640 = vadd.f32 0.0, %v1639
        %v1641 = vpop.f32.mrb[0].mxu0
        %1642 = vmatprep.mubr.f32.mxu0 0.0
        %1643 = vmatmul.mubr.f32.gmra.mrb[0].mxu0 %v1079
        %v1644 = vpop.f32.mrb[0].mxu0
        %v1645 = vadd.f32 0.0, %v1644
        %v1646 = vpop.f32.mrb[0].mxu0
        %1647 = vmatprep.mubr.f32.mxu0 0.0
        %1648 = vmatmul.mubr.f32.gmra.mrb[0].mxu0 %v1082
        %v1649 = vpop.f32.mrb[0].mxu0
        %v1650 = vadd.f32 0.0, %v1649
        %v1651 = vpop.f32.mrb[0].mxu0
        %1652 = vmatprep.mubr.f32.mxu0 0.0
        %1653 = vmatmul.mubr.f32.gmra.mrb[0].mxu0 %v1085
        %v1654 = vpop.f32.mrb[0].mxu0
        %v1655 = vadd.f32 0.0, %v1654
        %v1656 = vpop.f32.mrb[0].mxu0
        %1657 = vmatprep.mubr.f32.mxu0 0.0
        %1658 = vmatmul.mubr.f32.gmra.mrb[0].mxu0 %v1088
        %v1659 = vpop.f32.mrb[0].mxu0
        %v1660 = vadd.f32 0.0, %v1659
        %v1661 = vpop.f32.mrb[0].mxu0
        %1662 = vmatprep.mubr.f32.mxu0 0.0
        %1663 = vmatmul.mubr.f32.gmra.mrb[0].mxu0 %v1091
        %v1664 = vpop.f32.mrb[0].mxu0
        %v1665 = vadd.f32 0.0, %v1664
        %v1666 = vpop.f32.mrb[0].mxu0
        %1667 = vmatprep.mubr.f32.mxu0 0.0
        %1668 = vmatmul.mubr.f32.gmra.mrb[0].mxu0 %v1094
        %v1669 = vpop.f32.mrb[0].mxu0
        %v1670 = vadd.f32 0.0, %v1669
        %v1671 = vpop.f32.mrb[0].mxu0
        %1672 = vmatprep.mubr.f32.mxu0 0.0
        %1673 = vmatmul.mubr.f32.gmra.mrb[0].mxu0 %v1097
        %v1674 = vpop.f32.mrb[0].mxu0
        %v1675 = vadd.f32 0.0, %v1674
        %v1676 = vpop.f32.mrb[0].mxu0
        %1677 = vmatprep.mubr.f32.mxu0 0.0
        %1678 = vmatmul.mubr.f32.gmra.mrb[0].mxu0 %v1100
        %v1679 = vpop.f32.mrb[0].mxu0
        %v1680 = vadd.f32 0.0, %v1679
        %v1681 = vpop.f32.mrb[0].mxu0
        %1682 = vmatprep.mubr.f32.mxu0 0.0
        %1683 = vmatmul.mubr.f32.gmra.mrb[0].mxu0 %v1103
        %v1684 = vpop.f32.mrb[0].mxu0
        %v1685 = vadd.f32 0.0, %v1684
        %v1686 = vpop.f32.mrb[0].mxu0
        %1687 = vmatprep.mubr.f32.mxu0 0.0
        %1688 = vmatmul.mubr.f32.gmra.mrb[0].mxu0 %v1106
        %v1689 = vpop.f32.mrb[0].mxu0
        %v1690 = vadd.f32 0.0, %v1689
        %v1691 = vpop.f32.mrb[0].mxu0
        %1692 = vmatprep.mubr.f32.mxu0 0.0
        %1693 = vmatmul.mubr.f32.gmra.mrb[0].mxu0 %v1109
        %v1694 = vpop.f32.mrb[0].mxu0
        %v1695 = vadd.f32 0.0, %v1694
        %v1696 = vpop.f32.mrb[0].mxu0
        %1697 = vmatprep.mubr.f32.mxu0 0.0
        %1698 = vmatmul.mubr.f32.gmra.mrb[0].mxu0 %v1112
        %v1699 = vpop.f32.mrb[0].mxu0
        %v1700 = vadd.f32 0.0, %v1699
        %v1701 = vpop.f32.mrb[0].mxu0
        %1702 = vmatprep.mubr.f32.mxu0 0.0
        %1703 = vmatmul.mubr.f32.gmra.mrb[0].mxu0 %v1115
        %v1704 = vpop.f32.mrb[0].mxu0
        %v1705 = vadd.f32 0.0, %v1704
        %v1706 = vpop.f32.mrb[0].mxu0
        %1707 = vmatprep.mubr.f32.mxu0 0.0
        %1708 = vmatmul.mubr.f32.gmra.mrb[0].mxu0 %v1118
        %v1709 = vpop.f32.mrb[0].mxu0
        %v1710 = vadd.f32 0.0, %v1709
        %v1711 = vpop.f32.mrb[0].mxu0
        %1712 = vmatprep.mubr.f32.mxu0 0.0
        %1713 = vmatmul.mubr.f32.gmra.mrb[0].mxu0 %v1121
        %v1714 = vpop.f32.mrb[0].mxu0
        %v1715 = vadd.f32 0.0, %v1714
        %v1716 = vpop.f32.mrb[0].mxu0
        %1717 = vmatprep.mubr.f32.mxu0 0.0
        %1718 = vmatmul.mubr.f32.gmra.mrb[0].mxu0 %v1124
        %v1719 = vpop.f32.mrb[0].mxu0
        %v1720 = vadd.f32 0.0, %v1719
        %v1721 = vpop.f32.mrb[0].mxu0
        %1722 = vmatprep.mubr.f32.mxu0 0.0
        %1723 = vmatmul.mubr.f32.gmra.mrb[0].mxu0 %v1127
        %v1724 = vpop.f32.mrb[0].mxu0
        %v1725 = vadd.f32 0.0, %v1724
        %v1726 = vpop.f32.mrb[0].mxu0
        %1727 = vmatprep.mubr.f32.mxu0 0.0
        %1728 = vmatmul.mubr.f32.gmra.mrb[0].mxu0 %v1130
        %v1729 = vpop.f32.mrb[0].mxu0
        %v1730 = vadd.f32 0.0, %v1729
        %v1731 = vpop.f32.mrb[0].mxu0
        %1732 = vmatprep.mubr.f32.mxu0 0.0
        %1733 = vmatmul.mubr.f32.gmra.mrb[0].mxu0 %v1133
        %v1734 = vpop.f32.mrb[0].mxu0
        %v1735 = vadd.f32 0.0, %v1734
        %v1736 = vpop.f32.mrb[0].mxu0
        %1737 = vmatprep.mubr.f32.mxu0 0.0
        %1738 = vmatmul.mubr.f32.gmra.mrb[0].mxu0 %v1136
        %v1739 = vpop.f32.mrb[0].mxu0
        %v1740 = vadd.f32 0.0, %v1739
        %v1741 = vpop.f32.mrb[0].mxu0
        %1742 = vmatprep.mubr.f32.mxu0 0.0
        %1743 = vmatmul.mubr.f32.gmra.mrb[0].mxu0 %v1139
        %v1744 = vpop.f32.mrb[0].mxu0
        %v1745 = vadd.f32 0.0, %v1744
        %v1746 = vpop.f32.mrb[0].mxu0
        %1747 = vmatprep.mubr.f32.mxu0 0.0
        %1748 = vmatmul.mubr.f32.gmra.mrb[0].mxu0 %v1142
        %v1749 = vpop.f32.mrb[0].mxu0
        %v1750 = vadd.f32 0.0, %v1749
        %v1751 = vpop.f32.mrb[0].mxu0
        %1752 = vmatprep.mubr.f32.mxu0 0.0
        %1753 = vmatmul.mubr.f32.gmra.mrb[0].mxu0 %v1145
        %v1754 = vpop.f32.mrb[0].mxu0
        %v1755 = vadd.f32 0.0, %v1754
        %v1756 = vpop.f32.mrb[0].mxu0
        %1757 = vmatprep.mubr.f32.mxu0 0.0
        %1758 = vmatmul.mubr.f32.gmra.mrb[0].mxu0 %v1148
        %v1759 = vpop.f32.mrb[0].mxu0
        %v1760 = vadd.f32 0.0, %v1759
        %v1761 = vpop.f32.mrb[0].mxu0
        %1762 = vmatprep.mubr.f32.mxu0 0.0
        %1763 = vmatmul.mubr.f32.gmra.mrb[0].mxu0 %v1151
        %v1764 = vpop.f32.mrb[0].mxu0
        %v1765 = vadd.f32 0.0, %v1764
        %v1766 = vpop.f32.mrb[0].mxu0
        %1767 = vmatprep.mubr.f32.mxu0 0.0
        %1768 = vmatmul.mubr.f32.gmra.mrb[0].mxu0 %v1154
        %v1769 = vpop.f32.mrb[0].mxu0
        %v1770 = vadd.f32 0.0, %v1769
        %v1771 = vpop.f32.mrb[0].mxu0
        %1772 = vmatprep.mubr.f32.mxu0 0.0
        %1773 = vmatmul.mubr.f32.gmra.mrb[0].mxu0 %v1157
        %v1774 = vpop.f32.mrb[0].mxu0
        %v1775 = vadd.f32 0.0, %v1774
        %v1776 = vpop.f32.mrb[0].mxu0
        %1777 = vmatprep.mubr.f32.mxu0 0.0
        %1778 = vmatmul.mubr.f32.gmra.mrb[0].mxu0 %v1160
        %v1779 = vpop.f32.mrb[0].mxu0
        %v1780 = vadd.f32 0.0, %v1779
        %v1781 = vpop.f32.mrb[0].mxu0
        %1782 = vmatprep.mubr.f32.mxu0 0.0
        %1783 = vmatmul.mubr.f32.gmra.mrb[0].mxu0 %v1163
        %v1784 = vpop.f32.mrb[0].mxu0
        %v1785 = vadd.f32 0.0, %v1784
        %v1786 = vpop.f32.mrb[0].mxu0
        %1787 = vmatprep.mubr.f32.mxu0 0.0
        %1788 = vmatmul.mubr.f32.gmra.mrb[0].mxu0 %v1166
        %v1789 = vpop.f32.mrb[0].mxu0
        %v1790 = vadd.f32 0.0, %v1789
        %v1791 = vpop.f32.mrb[0].mxu0
        %1792 = vmatprep.mubr.f32.mxu0 0.0
        %1793 = vmatmul.mubr.f32.gmra.mrb[0].mxu0 %v1169
        %v1794 = vpop.f32.mrb[0].mxu0
        %v1795 = vadd.f32 0.0, %v1794
        %v1796 = vpop.f32.mrb[0].mxu0
        %1797 = vmatprep.mubr.f32.mxu0 0.0
        %1798 = vmatmul.mubr.f32.gmra.mrb[0].mxu0 %v1172
        %v1799 = vpop.f32.mrb[0].mxu0
        %v1800 = vadd.f32 0.0, %v1799
        %v1801 = vpop.f32.mrb[0].mxu0
        %1802 = vmatprep.mubr.f32.mxu0 0.0
        %1803 = vmatmul.mubr.f32.gmra.mrb[0].mxu0 %v1175
        %v1804 = vpop.f32.mrb[0].mxu0
        %v1805 = vadd.f32 0.0, %v1804
        %v1806 = vpop.f32.mrb[0].mxu0
        %1807 = vmatprep.mubr.f32.mxu0 0.0
        %1808 = vmatmul.mubr.f32.gmra.mrb[0].mxu0 %v1178
        %v1809 = vpop.f32.mrb[0].mxu0
        %v1810 = vadd.f32 0.0, %v1809
        %v1811 = vpop.f32.mrb[0].mxu0
        %1812 = vmatprep.mubr.f32.mxu0 0.0
        %1813 = vmatmul.mubr.f32.gmra.mrb[0].mxu0 %v1181
        %v1814 = vpop.f32.mrb[0].mxu0
        %v1815 = vadd.f32 0.0, %v1814
        %v1816 = vpop.f32.mrb[0].mxu0
        %1817 = vmatprep.mubr.f32.mxu0 0.0
        %1818 = vmatmul.mubr.f32.gmra.mrb[0].mxu0 %v1184
        %v1819 = vpop.f32.mrb[0].mxu0
        %v1820 = vadd.f32 0.0, %v1819
        %v1821 = vpop.f32.mrb[0].mxu0
        %1822 = vmatprep.mubr.f32.mxu0 0.0
        %1823 = vmatmul.mubr.f32.gmra.mrb[0].mxu0 %v1187
        %v1824 = vpop.f32.mrb[0].mxu0
        %v1825 = vadd.f32 0.0, %v1824
        %v1826 = vpop.f32.mrb[0].mxu0
        %1827 = vmatprep.mubr.f32.mxu0 0.0
        %1828 = vmatmul.mubr.f32.gmra.mrb[0].mxu0 %v1190
        %v1829 = vpop.f32.mrb[0].mxu0
        %v1830 = vadd.f32 0.0, %v1829
        %v1831 = vpop.f32.mrb[0].mxu0
        %1832 = vmatprep.mubr.f32.mxu0 0.0
        %1833 = vmatmul.mubr.f32.gmra.mrb[0].mxu0 %v1193
        %v1834 = vpop.f32.mrb[0].mxu0
        %v1835 = vadd.f32 0.0, %v1834
        %v1836 = vpop.f32.mrb[0].mxu0
        %1837 = vmatprep.mubr.f32.mxu0 0.0
        %1838 = vmatmul.mubr.f32.gmra.mrb[0].mxu0 %v1196
        %v1839 = vpop.f32.mrb[0].mxu0
        %v1840 = vadd.f32 0.0, %v1839
        %v1841 = vpop.f32.mrb[0].mxu0
        %1842 = vmatprep.mubr.f32.mxu0 0.0
        %1843 = vmatmul.mubr.f32.gmra.mrb[0].mxu0 %v1199
        %v1844 = vpop.f32.mrb[0].mxu0
        %v1845 = vadd.f32 0.0, %v1844
        %v1846 = vpop.f32.mrb[0].mxu0
        %1847 = vmatprep.mubr.f32.mxu0 0.0
        %1848 = vmatmul.mubr.f32.gmra.mrb[0].mxu0 %v1202
        %v1849 = vpop.f32.mrb[0].mxu0
        %v1850 = vadd.f32 0.0, %v1849
        %v1851 = vpop.f32.mrb[0].mxu0
        %1852 = vmatprep.mubr.f32.mxu0 0.0
        %1853 = vmatmul.mubr.f32.gmra.mrb[0].mxu0 %v1205
        %v1854 = vpop.f32.mrb[0].mxu0
        %v1855 = vadd.f32 0.0, %v1854
        %v1856 = vpop.f32.mrb[0].mxu0
        %1857 = vmatprep.mubr.f32.mxu0 0.0
        %1858 = vmatmul.mubr.f32.gmra.mrb[0].mxu0 %v1208
        %v1859 = vpop.f32.mrb[0].mxu0
        %v1860 = vadd.f32 0.0, %v1859
        %v1861 = vpop.f32.mrb[0].mxu0
        %1862 = vmatprep.mubr.f32.mxu0 0.0
        %1863 = vmatmul.mubr.f32.gmra.mrb[0].mxu0 %v1211
        %v1864 = vpop.f32.mrb[0].mxu0
        %v1865 = vadd.f32 0.0, %v1864
        %v1866 = vpop.f32.mrb[0].mxu0
        %1867 = vmatprep.mubr.f32.mxu0 0.0
        %1868 = vmatmul.mubr.f32.gmra.mrb[0].mxu0 %v1214
        %v1869 = vpop.f32.mrb[0].mxu0
        %v1870 = vadd.f32 0.0, %v1869
        %v1871 = vpop.f32.mrb[0].mxu0
        %1872 = vmatprep.mubr.f32.mxu0 0.0
        %1873 = vmatmul.mubr.f32.gmra.mrb[0].mxu0 %v1217
        %v1874 = vpop.f32.mrb[0].mxu0
        %v1875 = vadd.f32 0.0, %v1874
        %v1876 = vpop.f32.mrb[0].mxu0
        %1877 = vmatprep.mubr.f32.mxu0 0.0
        %1878 = vmatmul.mubr.f32.gmra.mrb[0].mxu0 %v1220
        %v1879 = vpop.f32.mrb[0].mxu0
        %v1880 = vadd.f32 0.0, %v1879
        %v1881 = vpop.f32.mrb[0].mxu0
        %1882 = vmatprep.mubr.f32.mxu0 0.0
        %1883 = vmatmul.mubr.f32.gmra.mrb[0].mxu0 %v1223
        %v1884 = vpop.f32.mrb[0].mxu0
        %v1885 = vadd.f32 0.0, %v1884
        %v1886 = vpop.f32.mrb[0].mxu0
        %1887 = vmatprep.mubr.f32.mxu0 0.0
        %1888 = vmatmul.mubr.f32.gmra.mrb[0].mxu0 %v1226
        %v1889 = vpop.f32.mrb[0].mxu0
        %v1890 = vadd.f32 0.0, %v1889
        %v1891 = vpop.f32.mrb[0].mxu0
        %1892 = vmatprep.mubr.f32.mxu0 0.0
        %1893 = vmatmul.mubr.f32.gmra.mrb[0].mxu0 %v1229
        %v1894 = vpop.f32.mrb[0].mxu0
        %v1895 = vadd.f32 0.0, %v1894
        %v1896 = vpop.f32.mrb[0].mxu0
        %1897 = vmatprep.mubr.f32.mxu0 0.0
        %1898 = vmatmul.mubr.f32.gmra.mrb[0].mxu0 %v1232
        %v1899 = vpop.f32.mrb[0].mxu0
        %v1900 = vadd.f32 0.0, %v1899
        %v1901 = vpop.f32.mrb[0].mxu0
        %1902 = vmatprep.mubr.f32.mxu0 0.0
        %1903 = vmatmul.mubr.f32.gmra.mrb[0].mxu0 %v1235
        %v1904 = vpop.f32.mrb[0].mxu0
        %v1905 = vadd.f32 0.0, %v1904
        %v1906 = vpop.f32.mrb[0].mxu0
        %1907 = vmatprep.mubr.f32.mxu0 0.0
        %1908 = vmatmul.mubr.f32.gmra.mrb[0].mxu0 %v1238
        %v1909 = vpop.f32.mrb[0].mxu0
        %v1910 = vadd.f32 0.0, %v1909
        %v1911 = vpop.f32.mrb[0].mxu0
        %1912 = vmatprep.mubr.f32.mxu0 0.0
        %1913 = vmatmul.mubr.f32.gmra.mrb[0].mxu0 %v1241
        %v1914 = vpop.f32.mrb[0].mxu0
        %v1915 = vadd.f32 0.0, %v1914
        %v1916 = vpop.f32.mrb[0].mxu0
        %1917 = vmatprep.mubr.f32.mxu0 0.0
        %1918 = vmatmul.mubr.f32.gmra.mrb[0].mxu0 %v1244
        %v1919 = vpop.f32.mrb[0].mxu0
        %v1920 = vadd.f32 0.0, %v1919
        %v1921 = vpop.f32.mrb[0].mxu0
        %1922 = vmatprep.mubr.f32.mxu0 0.0
        %1923 = vmatmul.mubr.f32.gmra.mrb[0].mxu0 %v1247
        %v1924 = vpop.f32.mrb[0].mxu0
        %v1925 = vadd.f32 0.0, %v1924
        %v1926 = vpop.f32.mrb[0].mxu0
        %1927 = vmatprep.mubr.f32.mxu0 0.0
        %1928 = vmatmul.mubr.f32.gmra.mrb[0].mxu0 %v1250
        %v1929 = vpop.f32.mrb[0].mxu0
        %v1930 = vadd.f32 0.0, %v1929
        %v1931 = vpop.f32.mrb[0].mxu0
        %1932 = vmatprep.mubr.f32.mxu0 0.0
        %1933 = vmatmul.mubr.f32.gmra.mrb[0].mxu0 %v1253
        %v1934 = vpop.f32.mrb[0].mxu0
        %v1935 = vadd.f32 0.0, %v1934
        %v1936 = vpop.f32.mrb[0].mxu0
        %1937 = vmatprep.mubr.f32.mxu0 0.0
        %1938 = vmatmul.mubr.f32.gmra.mrb[0].mxu0 %v1256
        %v1939 = vpop.f32.mrb[0].mxu0
        %v1940 = vadd.f32 0.0, %v1939
        %v1941 = vpop.f32.mrb[0].mxu0
        %1942 = vmatprep.mubr.f32.mxu0 0.0
        %1943 = vmatmul.mubr.f32.gmra.mrb[0].mxu0 %v1259
        %v1944 = vpop.f32.mrb[0].mxu0
        %v1945 = vadd.f32 0.0, %v1944
        %v1946 = vpop.f32.mrb[0].mxu0
        %1947 = vmatprep.mubr.f32.mxu0 0.0
        %1948 = vmatmul.mubr.f32.gmra.mrb[0].mxu0 %v1262
        %v1949 = vpop.f32.mrb[0].mxu0
        %v1950 = vadd.f32 0.0, %v1949
        %v1951 = vpop.f32.mrb[0].mxu0
        %1952 = vmatprep.mubr.f32.mxu0 0.0
        %1953 = vmatmul.mubr.f32.gmra.mrb[0].mxu0 %v1265
        %v1954 = vpop.f32.mrb[0].mxu0
        %v1955 = vadd.f32 0.0, %v1954
        %v1956 = vpop.f32.mrb[0].mxu0
        %1957 = vmatprep.mubr.f32.mxu0 0.0
        %1958 = vmatmul.mubr.f32.gmra.mrb[0].mxu0 %v1268
        %v1959 = vpop.f32.mrb[0].mxu0
        %v1960 = vadd.f32 0.0, %v1959
        %v1961 = vpop.f32.mrb[0].mxu0
        %1962 = vmatprep.mubr.f32.mxu0 0.0
        %1963 = vmatmul.mubr.f32.gmra.mrb[0].mxu0 %v1271
        %v1964 = vpop.f32.mrb[0].mxu0
        %v1965 = vadd.f32 0.0, %v1964
        %v1966 = vpop.f32.mrb[0].mxu0
        %1967 = vmatprep.mubr.f32.mxu0 0.0
        %1968 = vmatmul.mubr.f32.gmra.mrb[0].mxu0 %v1274
        %v1969 = vpop.f32.mrb[0].mxu0
        %v1970 = vadd.f32 0.0, %v1969
        %v1971 = vpop.f32.mrb[0].mxu0
        %1972 = vmatprep.mubr.f32.mxu0 0.0
        %1973 = vmatmul.mubr.f32.gmra.mrb[0].mxu0 %v1277
        %v1974 = vpop.f32.mrb[0].mxu0
        %v1975 = vadd.f32 0.0, %v1974
        %v1976 = vpop.f32.mrb[0].mxu0
        %1977 = vmatprep.mubr.f32.mxu0 0.0
        %1978 = vmatmul.mubr.f32.gmra.mrb[0].mxu0 %v1280
        %v1979 = vpop.f32.mrb[0].mxu0
        %v1980 = vadd.f32 0.0, %v1979
        %v1981 = vpop.f32.mrb[0].mxu0
        %1982 = vmatprep.mubr.f32.mxu0 0.0
        %1983 = vmatmul.mubr.f32.gmra.mrb[0].mxu0 %v1283
        %v1984 = vpop.f32.mrb[0].mxu0
        %v1985 = vadd.f32 0.0, %v1984
        %v1986 = vpop.f32.mrb[0].mxu0
        %1987 = vmatprep.mubr.f32.mxu0 0.0
        %1988 = vmatmul.mubr.f32.gmra.mrb[0].mxu0 %v1286
        %v1989 = vpop.f32.mrb[0].mxu0
        %v1990 = vadd.f32 0.0, %v1989
        %v1991 = vpop.f32.mrb[0].mxu0
        %1992 = vdwg.mxu0
        %1993 = vst.msk [vmem:[%s134] sm:$0xff] %vm859, %v1355
        %1994 = vst.msk [vmem:[%s134 + $0x8] sm:$0xff] %vm859, %v1360
        %1995 = vst.msk [vmem:[%s134 + $0x10] sm:$0xff] %vm859, %v1365
        %1996 = vst.msk [vmem:[%s134 + $0x18] sm:$0xff] %vm859, %v1370
        %1997 = vst.msk [vmem:[%s134 + $0x20] sm:$0xff] %vm859, %v1375
        %1998 = vst.msk [vmem:[%s134 + $0x28] sm:$0xff] %vm859, %v1380
        %1999 = vst.msk [vmem:[%s134 + $0x30] sm:$0xff] %vm859, %v1385
        %2000 = vst.msk [vmem:[%s134 + $0x38] sm:$0xff] %vm859, %v1390
        %2001 = vst.msk [vmem:[%s134 + $0x40] sm:$0xff] %vm859, %v1395
        %2002 = vst.msk [vmem:[%s134 + $0x48] sm:$0xff] %vm859, %v1400
        %2003 = vst.msk [vmem:[%s134 + $0x50] sm:$0xff] %vm859, %v1405
        %2004 = vst.msk [vmem:[%s134 + $0x58] sm:$0xff] %vm859, %v1410
        %2005 = vst.msk [vmem:[%s134 + $0x60] sm:$0xff] %vm859, %v1415
        %2006 = vst.msk [vmem:[%s134 + $0x68] sm:$0xff] %vm859, %v1420
        %2007 = vst.msk [vmem:[%s134 + $0x70] sm:$0xff] %vm859, %v1425
        %2008 = vst.msk [vmem:[%s134 + $0x78] sm:$0xff] %vm859, %v1430
        %2009 = vst.msk [vmem:[%s134 + $0x80] sm:$0xff] %vm859, %v1435
        %2010 = vst.msk [vmem:[%s134 + $0x88] sm:$0xff] %vm859, %v1440
        %2011 = vst.msk [vmem:[%s134 + $0x90] sm:$0xff] %vm859, %v1445
        %2012 = vst.msk [vmem:[%s134 + $0x98] sm:$0xff] %vm859, %v1450
        %2013 = vst.msk [vmem:[%s134 + $0xa0] sm:$0xff] %vm859, %v1455
        %2014 = vst.msk [vmem:[%s134 + $0xa8] sm:$0xff] %vm859, %v1460
        %2015 = vst.msk [vmem:[%s134 + $0xb0] sm:$0xff] %vm859, %v1465
        %2016 = vst.msk [vmem:[%s134 + $0xb8] sm:$0xff] %vm859, %v1470
        %2017 = vst.msk [vmem:[%s134 + $0xc0] sm:$0xff] %vm859, %v1475
        %2018 = vst.msk [vmem:[%s134 + $0xc8] sm:$0xff] %vm859, %v1480
        %2019 = vst.msk [vmem:[%s134 + $0xd0] sm:$0xff] %vm859, %v1485
        %2020 = vst.msk [vmem:[%s134 + $0xd8] sm:$0xff] %vm859, %v1490
        %2021 = vst.msk [vmem:[%s134 + $0xe0] sm:$0xff] %vm859, %v1495
        %2022 = vst.msk [vmem:[%s134 + $0xe8] sm:$0xff] %vm859, %v1500
        %2023 = vst.msk [vmem:[%s134 + $0xf0] sm:$0xff] %vm859, %v1505
        %2024 = vst.msk [vmem:[%s134 + $0xf8] sm:$0xff] %vm859, %v1510
        %2025 = vst.msk [vmem:[%s134 + $0x100] sm:$0xff] %vm859, %v1515
        %2026 = vst.msk [vmem:[%s134 + $0x108] sm:$0xff] %vm859, %v1520
        %2027 = vst.msk [vmem:[%s134 + $0x110] sm:$0xff] %vm859, %v1525
        %2028 = vst.msk [vmem:[%s134 + $0x118] sm:$0xff] %vm859, %v1530
        %2029 = vst.msk [vmem:[%s134 + $0x120] sm:$0xff] %vm859, %v1535
        %2030 = vst.msk [vmem:[%s134 + $0x128] sm:$0xff] %vm859, %v1540
        %2031 = vst.msk [vmem:[%s134 + $0x130] sm:$0xff] %vm859, %v1545
        %2032 = vst.msk [vmem:[%s134 + $0x138] sm:$0xff] %vm859, %v1550
        %2033 = vst.msk [vmem:[%s134 + $0x140] sm:$0xff] %vm859, %v1555
        %2034 = vst.msk [vmem:[%s134 + $0x148] sm:$0xff] %vm859, %v1560
        %2035 = vst.msk [vmem:[%s134 + $0x150] sm:$0xff] %vm859, %v1565
        %2036 = vst.msk [vmem:[%s134 + $0x158] sm:$0xff] %vm859, %v1570
        %2037 = vst.msk [vmem:[%s134 + $0x160] sm:$0xff] %vm859, %v1575
        %2038 = vst.msk [vmem:[%s134 + $0x168] sm:$0xff] %vm859, %v1580
        %2039 = vst.msk [vmem:[%s134 + $0x170] sm:$0xff] %vm859, %v1585
        %2040 = vst.msk [vmem:[%s134 + $0x178] sm:$0xff] %vm859, %v1590
        %2041 = vst.msk [vmem:[%s134 + $0x180] sm:$0xff] %vm859, %v1595
        %2042 = vst.msk [vmem:[%s134 + $0x188] sm:$0xff] %vm859, %v1600
        %2043 = vst.msk [vmem:[%s134 + $0x190] sm:$0xff] %vm859, %v1605
        %2044 = vst.msk [vmem:[%s134 + $0x198] sm:$0xff] %vm859, %v1610
        %2045 = vst.msk [vmem:[%s134 + $0x1a0] sm:$0xff] %vm859, %v1615
        %2046 = vst.msk [vmem:[%s134 + $0x1a8] sm:$0xff] %vm859, %v1620
        %2047 = vst.msk [vmem:[%s134 + $0x1b0] sm:$0xff] %vm859, %v1625
        %2048 = vst.msk [vmem:[%s134 + $0x1b8] sm:$0xff] %vm859, %v1630
        %2049 = vst.msk [vmem:[%s134 + $0x1c0] sm:$0xff] %vm859, %v1635
        %2050 = vst.msk [vmem:[%s134 + $0x1c8] sm:$0xff] %vm859, %v1640
        %2051 = vst.msk [vmem:[%s134 + $0x1d0] sm:$0xff] %vm859, %v1645
        %2052 = vst.msk [vmem:[%s134 + $0x1d8] sm:$0xff] %vm859, %v1650
        %2053 = vst.msk [vmem:[%s134 + $0x1e0] sm:$0xff] %vm859, %v1655
        %2054 = vst.msk [vmem:[%s134 + $0x1e8] sm:$0xff] %vm859, %v1660
        %2055 = vst.msk [vmem:[%s134 + $0x1f0] sm:$0xff] %vm859, %v1665
        %2056 = vst.msk [vmem:[%s134 + $0x1f8] sm:$0xff] %vm859, %v1670
        %2057 = vst.msk [vmem:[%s134 + $0x200] sm:$0xff] %vm859, %v1675
        %2058 = vst.msk [vmem:[%s134 + $0x208] sm:$0xff] %vm859, %v1680
        %2059 = vst.msk [vmem:[%s134 + $0x210] sm:$0xff] %vm859, %v1685
        %2060 = vst.msk [vmem:[%s134 + $0x218] sm:$0xff] %vm859, %v1690
        %2061 = vst.msk [vmem:[%s134 + $0x220] sm:$0xff] %vm859, %v1695
        %2062 = vst.msk [vmem:[%s134 + $0x228] sm:$0xff] %vm859, %v1700
        %2063 = vst.msk [vmem:[%s134 + $0x230] sm:$0xff] %vm859, %v1705
        %2064 = vst.msk [vmem:[%s134 + $0x238] sm:$0xff] %vm859, %v1710
        %2065 = vst.msk [vmem:[%s134 + $0x240] sm:$0xff] %vm859, %v1715
        %2066 = vst.msk [vmem:[%s134 + $0x248] sm:$0xff] %vm859, %v1720
        %2067 = vst.msk [vmem:[%s134 + $0x250] sm:$0xff] %vm859, %v1725
        %2068 = vst.msk [vmem:[%s134 + $0x258] sm:$0xff] %vm859, %v1730
        %2069 = vst.msk [vmem:[%s134 + $0x260] sm:$0xff] %vm859, %v1735
        %2070 = vst.msk [vmem:[%s134 + $0x268] sm:$0xff] %vm859, %v1740
        %2071 = vst.msk [vmem:[%s134 + $0x270] sm:$0xff] %vm859, %v1745
        %2072 = vst.msk [vmem:[%s134 + $0x278] sm:$0xff] %vm859, %v1750
        %2073 = vst.msk [vmem:[%s134 + $0x280] sm:$0xff] %vm859, %v1755
        %2074 = vst.msk [vmem:[%s134 + $0x288] sm:$0xff] %vm859, %v1760
        %2075 = vst.msk [vmem:[%s134 + $0x290] sm:$0xff] %vm859, %v1765
        %2076 = vst.msk [vmem:[%s134 + $0x298] sm:$0xff] %vm859, %v1770
        %2077 = vst.msk [vmem:[%s134 + $0x2a0] sm:$0xff] %vm859, %v1775
        %2078 = vst.msk [vmem:[%s134 + $0x2a8] sm:$0xff] %vm859, %v1780
        %2079 = vst.msk [vmem:[%s134 + $0x2b0] sm:$0xff] %vm859, %v1785
        %2080 = vst.msk [vmem:[%s134 + $0x2b8] sm:$0xff] %vm859, %v1790
        %2081 = vst.msk [vmem:[%s134 + $0x2c0] sm:$0xff] %vm859, %v1795
        %2082 = vst.msk [vmem:[%s134 + $0x2c8] sm:$0xff] %vm859, %v1800
        %2083 = vst.msk [vmem:[%s134 + $0x2d0] sm:$0xff] %vm859, %v1805
        %2084 = vst.msk [vmem:[%s134 + $0x2d8] sm:$0xff] %vm859, %v1810
        %2085 = vst.msk [vmem:[%s134 + $0x2e0] sm:$0xff] %vm859, %v1815
        %2086 = vst.msk [vmem:[%s134 + $0x2e8] sm:$0xff] %vm859, %v1820
        %2087 = vst.msk [vmem:[%s134 + $0x2f0] sm:$0xff] %vm859, %v1825
        %2088 = vst.msk [vmem:[%s134 + $0x2f8] sm:$0xff] %vm859, %v1830
        %2089 = vst.msk [vmem:[%s134 + $0x300] sm:$0xff] %vm859, %v1835
        %2090 = vst.msk [vmem:[%s134 + $0x308] sm:$0xff] %vm859, %v1840
        %2091 = vst.msk [vmem:[%s134 + $0x310] sm:$0xff] %vm859, %v1845
        %2092 = vst.msk [vmem:[%s134 + $0x318] sm:$0xff] %vm859, %v1850
        %2093 = vst.msk [vmem:[%s134 + $0x320] sm:$0xff] %vm859, %v1855
        %2094 = vst.msk [vmem:[%s134 + $0x328] sm:$0xff] %vm859, %v1860
        %2095 = vst.msk [vmem:[%s134 + $0x330] sm:$0xff] %vm859, %v1865
        %2096 = vst.msk [vmem:[%s134 + $0x338] sm:$0xff] %vm859, %v1870
        %2097 = vst.msk [vmem:[%s134 + $0x340] sm:$0xff] %vm859, %v1875
        %2098 = vst.msk [vmem:[%s134 + $0x348] sm:$0xff] %vm859, %v1880
        %2099 = vst.msk [vmem:[%s134 + $0x350] sm:$0xff] %vm859, %v1885
        %2100 = vst.msk [vmem:[%s134 + $0x358] sm:$0xff] %vm859, %v1890
        %2101 = vst.msk [vmem:[%s134 + $0x360] sm:$0xff] %vm859, %v1895
        %2102 = vst.msk [vmem:[%s134 + $0x368] sm:$0xff] %vm859, %v1900
        %2103 = vst.msk [vmem:[%s134 + $0x370] sm:$0xff] %vm859, %v1905
        %2104 = vst.msk [vmem:[%s134 + $0x378] sm:$0xff] %vm859, %v1910
        %2105 = vst.msk [vmem:[%s134 + $0x380] sm:$0xff] %vm859, %v1915
        %2106 = vst.msk [vmem:[%s134 + $0x388] sm:$0xff] %vm859, %v1920
        %2107 = vst.msk [vmem:[%s134 + $0x390] sm:$0xff] %vm859, %v1925
        %2108 = vst.msk [vmem:[%s134 + $0x398] sm:$0xff] %vm859, %v1930
        %2109 = vst.msk [vmem:[%s134 + $0x3a0] sm:$0xff] %vm859, %v1935
        %2110 = vst.msk [vmem:[%s134 + $0x3a8] sm:$0xff] %vm859, %v1940
        %2111 = vst.msk [vmem:[%s134 + $0x3b0] sm:$0xff] %vm859, %v1945
        %2112 = vst.msk [vmem:[%s134 + $0x3b8] sm:$0xff] %vm859, %v1950
        %2113 = vst.msk [vmem:[%s134 + $0x3c0] sm:$0xff] %vm859, %v1955
        %2114 = vst.msk [vmem:[%s134 + $0x3c8] sm:$0xff] %vm859, %v1960
        %2115 = vst.msk [vmem:[%s134 + $0x3d0] sm:$0xff] %vm859, %v1965
        %2116 = vst.msk [vmem:[%s134 + $0x3d8] sm:$0xff] %vm859, %v1970
        %2117 = vst.msk [vmem:[%s134 + $0x3e0] sm:$0xff] %vm859, %v1975
        %2118 = vst.msk [vmem:[%s134 + $0x3e8] sm:$0xff] %vm859, %v1980
        %2119 = vst.msk [vmem:[%s134 + $0x3f0] sm:$0xff] %vm859, %v1985
        %2120 = vst.msk [vmem:[%s134 + $0x3f8] sm:$0xff] %vm859, %v1990
        %s2121 = sand.u32 %s52, 1
        %s2122 = scalar_lea.sflag [#allocation4], %s2121
        %s2123 = sand.u32 %s52, 1
        %s2124 = smul.addr %s2123, 1024
        %s2125 = scalar_lea.vmem [#allocation5], %s2124
        // Predicated region
        $region29: #{spe_module.1} parent=23 // pred_check
          %p2126 = pneg %p62
        $region30: #{spe_module.1} parent=23 // pred_check_branch
          %2128 = sbr.rel (%p2126) target = $region32
        $region31: #{spe_module.1} parent=23 // pred_region
          %s2130 = ssub.s32 16384, 16384
          %2131 = vsyncadd %s2122, %s2130
          %s2132 = smul.addr %s18, 128
          %s2133 = smul.addr %s2132, 128
          %s2134 = scalar_lea.hbm %s1, %s2133
          %s2135 = sshll.u32 %s2125, 4
          %s2136 = int_to_ptr.vmem [resolvable:$true] %s2135
          %2141 = dma.vmem_to_hbm [thread:$0]  %s2136, 16384, %s2134, %s2122, 128, 128, 8
        $region32: #{spe_module.1} parent=23 // pred_fallthru
          _
      $region24: #{spe_module.1} parent=5 // pred_fallthru
        _
      %p2142 = scmp.le.s32.totalorder 2, %s13
      // Predicated region
      $region33: #{spe_module.1} parent=5 // pred_check
        %p2143 = pneg %p2142
      $region34: #{spe_module.1} parent=5 // pred_check_branch
        %2145 = sbr.rel (%p2143) target = $region36
      $region35: #{spe_module.1} parent=5 // pred_region
        %s2146 = ssub.s32 %s13, 2
        // Predicated region
        $region37: #{spe_module.1} parent=35 // pred_check
          %p2147 = pneg %p68
        $region38: #{spe_module.1} parent=35 // pred_check_branch
          %2149 = sbr.rel (%p2147) target = $region40
        $region39: #{spe_module.1} parent=35 // pred_region
          %s2150 = sand.u32 %s53, 1
          %s2151 = scalar_lea.sflag [#allocation4], %s2150
          %s2152 = sand.u32 %s53, 1
          %s2153 = smul.addr %s2152, 1024
          %s2154 = scalar_lea.vmem [#allocation5], %s2153
          %2155 = dma.done %s2151, 16384
        $region40: #{spe_module.1} parent=35 // pred_fallthru
          _
      $region36: #{spe_module.1} parent=5 // pred_fallthru
        _
    $region6: #{spe_module.1} parent=1 // loop_footer
      %s17 = sadd.s32 1, %s13
    $region7: #{spe_module.1} parent=1 // loop_footer_branch
      %12 = sbr.rel target = $region3
    $region8: #{spe_module.1} parent=1 // loop_exit
      _
    %2156 = vsyncpa [#allocation3], 1
    %s2157 = scalar_lea.sflag [#allocation3], 1
    %2158 = vsyncpa %s2157, 1
    %2159 = vsyncpa [#allocation4], 1
    %s2160 = scalar_lea.sflag [#allocation4], 1
    %2161 = vsyncpa %s2160, 1

</llo_original>
